<compile_context>
chip_gen: v5e
topology: v5e:2x2
jax: 0.10.0
libtpu: 0.0.40
codegen_flags: <defaults>
</compile_context>

<pallas_src>
import numpy as np

import jax
import jax.numpy as jnp
from jax import lax
from jax.experimental import pallas as pl
from jax.experimental.pallas import tpu as pltpu


def conv_size_cal(w, kernel, stride, padding=0, dilation=1):
    return (w + 2 * padding - dilation * (kernel - 1) - 1) // stride + 1


def _round_up(x, m):
    return (x + m - 1) // m * m


_VMEM = pl.BlockSpec(memory_space=pltpu.MemorySpace.VMEM)


# ---------------------------------------------------------------------------
# Fused kernel: conv1 -> conv2 -> conv3 -> flatten -> fc1 -> fc2
# ---------------------------------------------------------------------------
def _dqn_fused_kernel(x_ref,
                      w1_ref, l1_ref, b1_ref,
                      w2_ref, l2_ref, b2_ref,
                      w3_ref, l3_ref, b3_ref,
                      wf1_ref, bf1_ref, wf2_ref, bf2_ref,
                      o_ref):
    n, cin = x_ref.shape[0], x_ref.shape[1]

    # conv1 input: rows (n, h), cols (ci, w).  Built with aligned concats only
    # (folds the NCHW layout handling into the kernel; no wrapper transpose).
    samples = []
    for nn in range(n):
        planes = [x_ref[nn, ci, :, :].astype(jnp.bfloat16) for ci in range(cin)]
        samples.append(jnp.concatenate(planes, axis=1))        # (H, Cin*W)
    act = jnp.concatenate(samples, axis=0)                      # (N*H, Cin*W)

    def conv_block(a, w_ref, l_ref, b_ref):
        # a:     (rows_in, W_in*Cin)        bf16
        # w_ref: (kh, W_in*Cin, OW*Cout)    bf16  banded W-direction matrices
        # l_ref: (rows_out, kh*rows_in)     bf16  0/1 H-direction selection
        # b_ref: (1, OW*Cout)               f32
        kh = w_ref.shape[0]
        z = jnp.concatenate(
            [jnp.dot(a, w_ref[i], preferred_element_type=jnp.float32)
             for i in range(kh)], axis=0).astype(jnp.bfloat16)   # (kh*rows_in, OW*Cout)
        pre = jnp.dot(l_ref[...], z, preferred_element_type=jnp.float32)
        return jnp.maximum(pre + b_ref[...], 0.0)                # f32 (rows_out, OW*Cout)

    a1 = conv_block(act, w1_ref, l1_ref, b1_ref).astype(jnp.bfloat16)   # (N*R1, OW1*16)
    a2 = conv_block(a1, w2_ref, l2_ref, b2_ref).astype(jnp.bfloat16)    # (N*R2, OW2*32)

    # conv3 + flatten: per output row oh3 the selection matmul emits an
    # (N, OW3*C3) block; lane-concatenating the OH3 blocks IS the flatten
    # (fc1 weights are pre-permuted to this (h3, w3, c3) feature order).
    k3 = w3_ref.shape[0]
    z3 = jnp.concatenate(
        [jnp.dot(a2, w3_ref[i], preferred_element_type=jnp.float32)
         for i in range(k3)], axis=0).astype(jnp.bfloat16)       # (k3*N*R2, OW3*C3)
    oh3 = l3_ref.shape[0]
    flat = jnp.concatenate(
        [jnp.dot(l3_ref[p], z3, preferred_element_type=jnp.float32)
         for p in range(oh3)], axis=1)                           # (N, OH3*OW3*C3)
    flat = jnp.maximum(flat + b3_ref[...], 0.0).astype(jnp.bfloat16)

    # fc1 + fc2 (single big-K matmuls).
    h1 = jnp.dot(flat, wf1_ref[...], preferred_element_type=jnp.float32)
    h1 = jnp.maximum(h1 + bf1_ref[...], 0.0).astype(jnp.bfloat16)
    out = jnp.dot(h1, wf2_ref[...], preferred_element_type=jnp.float32) + bf2_ref[...]
    o_ref[...] = out                                             # (N, action_dims) f32


def dqn_conv_forward(prep, x):
    """x: (N, 2, H, W) float32 NCHW -> (N, action_dims) float32."""
    n = x.shape[0]
    # Selection matrices bake in the batch size; verify via (static) shapes.
    assert n == prep["conv3_sel"].shape[1], "prepare_params was run for a different batch"
    act = prep["fc2_b"].shape[1]
    return pl.pallas_call(
        _dqn_fused_kernel,
        out_shape=jax.ShapeDtypeStruct((n, act), jnp.float32),
        in_specs=[_VMEM] * 14,
        out_specs=_VMEM,
    )(x,
      prep["conv1_bw"], prep["conv1_sel"], prep["conv1_b"],
      prep["conv2_bw"], prep["conv2_sel"], prep["conv2_b"],
      prep["conv3_bw"], prep["conv3_sel"], prep["conv3_b"],
      prep["fc1_w"], prep["fc1_b"], prep["fc2_w"], prep["fc2_b"])


# ---------------------------------------------------------------------------
# One-time weight repacking (numpy, at init; never per forward step)
# ---------------------------------------------------------------------------
def _banded_w(w_conv, w_in, stride, cin_minor):
    """Per kernel-row-offset banded matrices B_i: (kh, W_in*Cin, OW*Cout).
       Input columns are (w, ci) if cin_minor else (ci, w)."""
    cout, cin, kh, kw = w_conv.shape
    ow = conv_size_cal(w_in, kw, stride)
    bw = np.zeros((kh, w_in * cin, ow * cout), np.float32)
    for i in range(kh):
        for o in range(ow):
            for j in range(kw):
                w_idx = stride * o + j
                for ci in range(cin):
                    row = w_idx * cin + ci if cin_minor else ci * w_in + w_idx
                    bw[i, row, o * cout:(o + 1) * cout] = w_conv[:, ci, i, j]
    return bw


def _row_select(n, rows_in_per_n, rows_out_per_n, oh, kh, stride):
    """0/1 matrix: out row (n, oh) sums input rows (i, n, stride*oh + i) of the
       vertically concatenated per-offset blocks."""
    rows_in = n * rows_in_per_n
    sel = np.zeros((n * rows_out_per_n, kh * rows_in), np.float32)
    for nn in range(n):
        for o in range(oh):
            for i in range(kh):
                sel[nn * rows_out_per_n + o,
                    i * rows_in + nn * rows_in_per_n + stride * o + i] = 1.0
    return sel


def _row_select_per_oh(n, rows_in_per_n, oh, kh, stride):
    """Same as _row_select but emits one (N, ...) selection per output row oh
       (used for conv3 so the flatten falls out of a lane-concat)."""
    rows_in = n * rows_in_per_n
    sel = np.zeros((oh, n, kh * rows_in), np.float32)
    for o in range(oh):
        for nn in range(n):
            for i in range(kh):
                sel[o, nn, i * rows_in + nn * rows_in_per_n + stride * o + i] = 1.0
    return sel


def prepare_params(params, img_w, img_h, batch):
    n = batch
    s = 2
    w1 = np.asarray(params["conv1_w"], np.float32)
    w2 = np.asarray(params["conv2_w"], np.float32)
    w3 = np.asarray(params["conv3_w"], np.float32)

    oh1, ow1 = conv_size_cal(img_h, 5, s), conv_size_cal(img_w, 5, s)
    oh2, ow2 = conv_size_cal(oh1, 5, s), conv_size_cal(ow1, 5, s)
    oh3, ow3 = conv_size_cal(oh2, 3, s), conv_size_cal(ow2, 3, s)
    r1, r2 = _round_up(oh1, 8), _round_up(oh2, 8)      # sublane-aligned row padding
    c3 = w3.shape[0]

    b1_bw = _banded_w(w1, img_w, s, cin_minor=False)   # conv1 input cols are (ci, w)
    b2_bw = _banded_w(w2, ow1, s, cin_minor=True)      # later acts have cols (w, c)
    b3_bw = _banded_w(w3, ow2, s, cin_minor=True)

    sel1 = _row_select(n, img_h, r1, oh1, 5, s)
    sel2 = _row_select(n, r1, r2, oh2, 5, s)
    sel3 = _row_select_per_oh(n, r2, oh3, 3, s)

    # fc1: permute PyTorch NCHW-flatten columns (c3,h3,w3) -> ours (h3,w3,c3),
    # then transpose to (in, out).  fc2: transpose to (in, out).
    f1 = np.asarray(params["fc1_w"], np.float32)
    f1 = f1.reshape(f1.shape[0], c3, oh3, ow3).transpose(2, 3, 1, 0).reshape(oh3 * ow3 * c3, -1)
    f2 = np.asarray(params["fc2_w"], np.float32).T

    def bf16(a):
        return jnp.asarray(a, jnp.bfloat16)

    def frow(a):
        return jnp.asarray(np.asarray(a, np.float32).reshape(1, -1), jnp.float32)

    return {
        "conv1_bw": bf16(b1_bw), "conv1_sel": bf16(sel1),
        "conv1_b": frow(np.tile(np.asarray(params["conv1_b"], np.float32), ow1)),
        "conv2_bw": bf16(b2_bw), "conv2_sel": bf16(sel2),
        "conv2_b": frow(np.tile(np.asarray(params["conv2_b"], np.float32), ow2)),
        "conv3_bw": bf16(b3_bw), "conv3_sel": bf16(sel3),
        "conv3_b": frow(np.tile(np.asarray(params["conv3_b"], np.float32), oh3 * ow3)),
        "fc1_w": bf16(f1), "fc1_b": frow(params["fc1_b"]),
        "fc2_w": bf16(f2), "fc2_b": frow(params["fc2_b"]),
    }


# ---------------------------------------------------------------------------
# Parameters in PyTorch layout + pure-JAX f32 reference (guards repack math)
# ---------------------------------------------------------------------------
def init_params(key, w, h, action_dims):
    def uniform(k, shape, fan_in):
        bound = 1.0 / (fan_in ** 0.5)
        return jax.random.uniform(k, shape, jnp.float32, -bound, bound)

    w1_, h1_ = conv_size_cal(w, 5, 2), conv_size_cal(h, 5, 2)
    w2_, h2_ = conv_size_cal(w1_, 5, 2), conv_size_cal(h1_, 5, 2)
    w3_, h3_ = conv_size_cal(w2_, 3, 2), conv_size_cal(h2_, 3, 2)
    flat = 64 * w3_ * h3_

    ks = jax.random.split(key, 10)
    return {
        "conv1_w": uniform(ks[0], (16, 2, 5, 5), 2 * 5 * 5),
        "conv1_b": uniform(ks[1], (16,), 2 * 5 * 5),
        "conv2_w": uniform(ks[2], (32, 16, 5, 5), 16 * 5 * 5),
        "conv2_b": uniform(ks[3], (32,), 16 * 5 * 5),
        "conv3_w": uniform(ks[4], (64, 32, 3, 3), 32 * 3 * 3),
        "conv3_b": uniform(ks[5], (64,), 32 * 3 * 3),
        "fc1_w": uniform(ks[6], (256, flat), flat),          # PyTorch (out, in)
        "fc1_b": uniform(ks[7], (256,), flat),
        "fc2_w": uniform(ks[8], (action_dims, 256), 256),
        "fc2_b": uniform(ks[9], (action_dims,), 256),
    }


def _reference_forward(params, x):
    def conv(a, w, b):
        y = lax.conv_general_dilated(a, w, (2, 2), "VALID",
                                     dimension_numbers=("NCHW", "OIHW", "NCHW"))
        return jax.nn.relu(y + b[None, :, None, None])

    a = conv(x, params["conv1_w"], params["conv1_b"])
    a = conv(a, params["conv2_w"], params["conv2_b"])
    a = conv(a, params["conv3_w"], params["conv3_b"])
    a = a.reshape(a.shape[0], -1)
    h = jax.nn.relu(a @ params["fc1_w"].T + params["fc1_b"])
    return h @ params["fc2_w"].T + params["fc2_b"]


if __name__ == "__main__":
    W = H = 32
    BATCH = 2
    ACTION_DIMS = 4

    key = jax.random.PRNGKey(0)
    k_param, k_x = jax.random.split(key)
    params = init_params(k_param, W, H, ACTION_DIMS)
    prep = prepare_params(params, W, H, BATCH)
    x = jax.random.normal(k_x, (BATCH, 2, H, W), dtype=jnp.float32)

    fwd = jax.jit(dqn_conv_forward)
    out = jax.block_until_ready(fwd(prep, x))
    assert out.shape == (BATCH, ACTION_DIMS), out.shape

    ref = jax.block_until_ready(_reference_forward(params, x))
    np.testing.assert_allclose(np.asarray(out), np.asarray(ref), rtol=5e-2, atol=1e-2)
    print("KERNEL_OK")
</pallas_src>

<mosaic_0001>
module attributes {stable_mosaic.version = 11 : i64} {
  func.func @_dqn_fused_kernel(%arg0: memref<2x2x32x32xf32, #tpu.memory_space<vmem>>, %arg1: memref<5x64x224xbf16, #tpu.memory_space<vmem>>, %arg2: memref<32x320xbf16, #tpu.memory_space<vmem>>, %arg3: memref<1x224xf32, #tpu.memory_space<vmem>>, %arg4: memref<5x224x160xbf16, #tpu.memory_space<vmem>>, %arg5: memref<16x160xbf16, #tpu.memory_space<vmem>>, %arg6: memref<1x160xf32, #tpu.memory_space<vmem>>, %arg7: memref<3x160x128xbf16, #tpu.memory_space<vmem>>, %arg8: memref<2x2x48xbf16, #tpu.memory_space<vmem>>, %arg9: memref<1x256xf32, #tpu.memory_space<vmem>>, %arg10: memref<256x256xbf16, #tpu.memory_space<vmem>>, %arg11: memref<1x256xf32, #tpu.memory_space<vmem>>, %arg12: memref<256x4xbf16, #tpu.memory_space<vmem>>, %arg13: memref<1x4xf32, #tpu.memory_space<vmem>>, %arg14: memref<2x4xf32, #tpu.memory_space<vmem>>) attributes {dimension_semantics = [], scalar_prefetch = 0 : i64, scratch_operands = 0 : i64, tpu.core_type = #tpu.core_type<tc>} {
    %c0 = arith.constant 0 : index
    %c0_0 = arith.constant 0 : index
    %c0_1 = arith.constant 0 : index
    %c0_2 = arith.constant 0 : index
    %0 = vector.load %arg0[%c0, %c0_0, %c0_1, %c0_2] : memref<2x2x32x32xf32, #tpu.memory_space<vmem>>, vector<1x1x32x32xf32>
    %1 = vector.shape_cast %0 : vector<1x1x32x32xf32> to vector<32x32xf32>
    %2 = arith.truncf %1 : vector<32x32xf32> to vector<32x32xbf16>
    %c0_3 = arith.constant 0 : index
    %c1 = arith.constant 1 : index
    %c0_4 = arith.constant 0 : index
    %c0_5 = arith.constant 0 : index
    %3 = vector.load %arg0[%c0_3, %c1, %c0_4, %c0_5] : memref<2x2x32x32xf32, #tpu.memory_space<vmem>>, vector<1x1x32x32xf32>
    %4 = vector.shape_cast %3 : vector<1x1x32x32xf32> to vector<32x32xf32>
    %5 = arith.truncf %4 : vector<32x32xf32> to vector<32x32xbf16>
    %6 = tpu.concatenate %2, %5 in 1 : vector<32x32xbf16>, vector<32x32xbf16> -> vector<32x64xbf16>
    %c1_6 = arith.constant 1 : index
    %c0_7 = arith.constant 0 : index
    %c0_8 = arith.constant 0 : index
    %c0_9 = arith.constant 0 : index
    %7 = vector.load %arg0[%c1_6, %c0_7, %c0_8, %c0_9] : memref<2x2x32x32xf32, #tpu.memory_space<vmem>>, vector<1x1x32x32xf32>
    %8 = vector.shape_cast %7 : vector<1x1x32x32xf32> to vector<32x32xf32>
    %9 = arith.truncf %8 : vector<32x32xf32> to vector<32x32xbf16>
    %c1_10 = arith.constant 1 : index
    %c1_11 = arith.constant 1 : index
    %c0_12 = arith.constant 0 : index
    %c0_13 = arith.constant 0 : index
    %10 = vector.load %arg0[%c1_10, %c1_11, %c0_12, %c0_13] : memref<2x2x32x32xf32, #tpu.memory_space<vmem>>, vector<1x1x32x32xf32>
    %11 = vector.shape_cast %10 : vector<1x1x32x32xf32> to vector<32x32xf32>
    %12 = arith.truncf %11 : vector<32x32xf32> to vector<32x32xbf16>
    %13 = tpu.concatenate %9, %12 in 1 : vector<32x32xbf16>, vector<32x32xbf16> -> vector<32x64xbf16>
    %14 = tpu.concatenate %6, %13 in 0 : vector<32x64xbf16>, vector<32x64xbf16> -> vector<64x64xbf16>
    %c0_14 = arith.constant 0 : index
    %c0_15 = arith.constant 0 : index
    %c0_16 = arith.constant 0 : index
    %15 = vector.load %arg1[%c0_14, %c0_15, %c0_16] : memref<5x64x224xbf16, #tpu.memory_space<vmem>>, vector<1x64x224xbf16>
    %16 = vector.shape_cast %15 : vector<1x64x224xbf16> to vector<64x224xbf16>
    %cst = arith.constant dense<0.000000e+00> : vector<64x224xf32>
    %17 = tpu.matmul %14, %16, %cst {dimension_numbers = #tpu.dot_dimension_numbers<[1], [0], [0], [1], [0, 0, 1, 1], [], []>} : vector<64x64xbf16>, vector<64x224xbf16>, vector<64x224xf32> -> vector<64x224xf32>
    %c1_17 = arith.constant 1 : index
    %c0_18 = arith.constant 0 : index
    %c0_19 = arith.constant 0 : index
    %18 = vector.load %arg1[%c1_17, %c0_18, %c0_19] : memref<5x64x224xbf16, #tpu.memory_space<vmem>>, vector<1x64x224xbf16>
    %19 = vector.shape_cast %18 : vector<1x64x224xbf16> to vector<64x224xbf16>
    %cst_20 = arith.constant dense<0.000000e+00> : vector<64x224xf32>
    %20 = tpu.matmul %14, %19, %cst_20 {dimension_numbers = #tpu.dot_dimension_numbers<[1], [0], [0], [1], [0, 0, 1, 1], [], []>} : vector<64x64xbf16>, vector<64x224xbf16>, vector<64x224xf32> -> vector<64x224xf32>
    %c2 = arith.constant 2 : index
    %c0_21 = arith.constant 0 : index
    %c0_22 = arith.constant 0 : index
    %21 = vector.load %arg1[%c2, %c0_21, %c0_22] : memref<5x64x224xbf16, #tpu.memory_space<vmem>>, vector<1x64x224xbf16>
    %22 = vector.shape_cast %21 : vector<1x64x224xbf16> to vector<64x224xbf16>
    %cst_23 = arith.constant dense<0.000000e+00> : vector<64x224xf32>
    %23 = tpu.matmul %14, %22, %cst_23 {dimension_numbers = #tpu.dot_dimension_numbers<[1], [0], [0], [1], [0, 0, 1, 1], [], []>} : vector<64x64xbf16>, vector<64x224xbf16>, vector<64x224xf32> -> vector<64x224xf32>
    %c3 = arith.constant 3 : index
    %c0_24 = arith.constant 0 : index
    %c0_25 = arith.constant 0 : index
    %24 = vector.load %arg1[%c3, %c0_24, %c0_25] : memref<5x64x224xbf16, #tpu.memory_space<vmem>>, vector<1x64x224xbf16>
    %25 = vector.shape_cast %24 : vector<1x64x224xbf16> to vector<64x224xbf16>
    %cst_26 = arith.constant dense<0.000000e+00> : vector<64x224xf32>
    %26 = tpu.matmul %14, %25, %cst_26 {dimension_numbers = #tpu.dot_dimension_numbers<[1], [0], [0], [1], [0, 0, 1, 1], [], []>} : vector<64x64xbf16>, vector<64x224xbf16>, vector<64x224xf32> -> vector<64x224xf32>
    %c4 = arith.constant 4 : index
    %c0_27 = arith.constant 0 : index
    %c0_28 = arith.constant 0 : index
    %27 = vector.load %arg1[%c4, %c0_27, %c0_28] : memref<5x64x224xbf16, #tpu.memory_space<vmem>>, vector<1x64x224xbf16>
    %28 = vector.shape_cast %27 : vector<1x64x224xbf16> to vector<64x224xbf16>
    %cst_29 = arith.constant dense<0.000000e+00> : vector<64x224xf32>
    %29 = tpu.matmul %14, %28, %cst_29 {dimension_numbers = #tpu.dot_dimension_numbers<[1], [0], [0], [1], [0, 0, 1, 1], [], []>} : vector<64x64xbf16>, vector<64x224xbf16>, vector<64x224xf32> -> vector<64x224xf32>
    %30 = tpu.concatenate %17, %20, %23, %26, %29 in 0 : vector<64x224xf32>, vector<64x224xf32>, vector<64x224xf32>, vector<64x224xf32>, vector<64x224xf32> -> vector<320x224xf32>
    %31 = arith.truncf %30 : vector<320x224xf32> to vector<320x224xbf16>
    %c0_30 = arith.constant 0 : index
    %c0_31 = arith.constant 0 : index
    %32 = vector.load %arg2[%c0_30, %c0_31] : memref<32x320xbf16, #tpu.memory_space<vmem>>, vector<32x320xbf16>
    %cst_32 = arith.constant dense<0.000000e+00> : vector<32x224xf32>
    %33 = tpu.matmul %32, %31, %cst_32 {dimension_numbers = #tpu.dot_dimension_numbers<[1], [0], [0], [1], [0, 0, 1, 1], [], []>} : vector<32x320xbf16>, vector<320x224xbf16>, vector<32x224xf32> -> vector<32x224xf32>
    %c0_33 = arith.constant 0 : index
    %c0_34 = arith.constant 0 : index
    %34 = vector.load %arg3[%c0_33, %c0_34] : memref<1x224xf32, #tpu.memory_space<vmem>>, vector<1x224xf32>
    %35 = vector.broadcast %34 : vector<1x224xf32> to vector<32x224xf32>
    %36 = arith.addf %33, %35 : vector<32x224xf32>
    %cst_35 = arith.constant 0.000000e+00 : f32
    %37 = vector.broadcast %cst_35 : f32 to vector<32x224xf32>
    %38 = arith.maximumf %36, %37 : vector<32x224xf32>
    %39 = arith.truncf %38 : vector<32x224xf32> to vector<32x224xbf16>
    %c0_36 = arith.constant 0 : index
    %c0_37 = arith.constant 0 : index
    %c0_38 = arith.constant 0 : index
    %40 = vector.load %arg4[%c0_36, %c0_37, %c0_38] : memref<5x224x160xbf16, #tpu.memory_space<vmem>>, vector<1x224x160xbf16>
    %41 = vector.shape_cast %40 : vector<1x224x160xbf16> to vector<224x160xbf16>
    %cst_39 = arith.constant dense<0.000000e+00> : vector<32x160xf32>
    %42 = tpu.matmul %39, %41, %cst_39 {dimension_numbers = #tpu.dot_dimension_numbers<[1], [0], [0], [1], [0, 0, 1, 1], [], []>} : vector<32x224xbf16>, vector<224x160xbf16>, vector<32x160xf32> -> vector<32x160xf32>
    %c1_40 = arith.constant 1 : index
    %c0_41 = arith.constant 0 : index
    %c0_42 = arith.constant 0 : index
    %43 = vector.load %arg4[%c1_40, %c0_41, %c0_42] : memref<5x224x160xbf16, #tpu.memory_space<vmem>>, vector<1x224x160xbf16>
    %44 = vector.shape_cast %43 : vector<1x224x160xbf16> to vector<224x160xbf16>
    %cst_43 = arith.constant dense<0.000000e+00> : vector<32x160xf32>
    %45 = tpu.matmul %39, %44, %cst_43 {dimension_numbers = #tpu.dot_dimension_numbers<[1], [0], [0], [1], [0, 0, 1, 1], [], []>} : vector<32x224xbf16>, vector<224x160xbf16>, vector<32x160xf32> -> vector<32x160xf32>
    %c2_44 = arith.constant 2 : index
    %c0_45 = arith.constant 0 : index
    %c0_46 = arith.constant 0 : index
    %46 = vector.load %arg4[%c2_44, %c0_45, %c0_46] : memref<5x224x160xbf16, #tpu.memory_space<vmem>>, vector<1x224x160xbf16>
    %47 = vector.shape_cast %46 : vector<1x224x160xbf16> to vector<224x160xbf16>
    %cst_47 = arith.constant dense<0.000000e+00> : vector<32x160xf32>
    %48 = tpu.matmul %39, %47, %cst_47 {dimension_numbers = #tpu.dot_dimension_numbers<[1], [0], [0], [1], [0, 0, 1, 1], [], []>} : vector<32x224xbf16>, vector<224x160xbf16>, vector<32x160xf32> -> vector<32x160xf32>
    %c3_48 = arith.constant 3 : index
    %c0_49 = arith.constant 0 : index
    %c0_50 = arith.constant 0 : index
    %49 = vector.load %arg4[%c3_48, %c0_49, %c0_50] : memref<5x224x160xbf16, #tpu.memory_space<vmem>>, vector<1x224x160xbf16>
    %50 = vector.shape_cast %49 : vector<1x224x160xbf16> to vector<224x160xbf16>
    %cst_51 = arith.constant dense<0.000000e+00> : vector<32x160xf32>
    %51 = tpu.matmul %39, %50, %cst_51 {dimension_numbers = #tpu.dot_dimension_numbers<[1], [0], [0], [1], [0, 0, 1, 1], [], []>} : vector<32x224xbf16>, vector<224x160xbf16>, vector<32x160xf32> -> vector<32x160xf32>
    %c4_52 = arith.constant 4 : index
    %c0_53 = arith.constant 0 : index
    %c0_54 = arith.constant 0 : index
    %52 = vector.load %arg4[%c4_52, %c0_53, %c0_54] : memref<5x224x160xbf16, #tpu.memory_space<vmem>>, vector<1x224x160xbf16>
    %53 = vector.shape_cast %52 : vector<1x224x160xbf16> to vector<224x160xbf16>
    %cst_55 = arith.constant dense<0.000000e+00> : vector<32x160xf32>
    %54 = tpu.matmul %39, %53, %cst_55 {dimension_numbers = #tpu.dot_dimension_numbers<[1], [0], [0], [1], [0, 0, 1, 1], [], []>} : vector<32x224xbf16>, vector<224x160xbf16>, vector<32x160xf32> -> vector<32x160xf32>
    %55 = tpu.concatenate %42, %45, %48, %51, %54 in 0 : vector<32x160xf32>, vector<32x160xf32>, vector<32x160xf32>, vector<32x160xf32>, vector<32x160xf32> -> vector<160x160xf32>
    %56 = arith.truncf %55 : vector<160x160xf32> to vector<160x160xbf16>
    %c0_56 = arith.constant 0 : index
    %c0_57 = arith.constant 0 : index
    %57 = vector.load %arg5[%c0_56, %c0_57] : memref<16x160xbf16, #tpu.memory_space<vmem>>, vector<16x160xbf16>
    %cst_58 = arith.constant dense<0.000000e+00> : vector<16x160xf32>
    %58 = tpu.matmul %57, %56, %cst_58 {dimension_numbers = #tpu.dot_dimension_numbers<[1], [0], [0], [1], [0, 0, 1, 1], [], []>} : vector<16x160xbf16>, vector<160x160xbf16>, vector<16x160xf32> -> vector<16x160xf32>
    %c0_59 = arith.constant 0 : index
    %c0_60 = arith.constant 0 : index
    %59 = vector.load %arg6[%c0_59, %c0_60] : memref<1x160xf32, #tpu.memory_space<vmem>>, vector<1x160xf32>
    %60 = vector.broadcast %59 : vector<1x160xf32> to vector<16x160xf32>
    %61 = arith.addf %58, %60 : vector<16x160xf32>
    %cst_61 = arith.constant 0.000000e+00 : f32
    %62 = vector.broadcast %cst_61 : f32 to vector<16x160xf32>
    %63 = arith.maximumf %61, %62 : vector<16x160xf32>
    %64 = arith.truncf %63 : vector<16x160xf32> to vector<16x160xbf16>
    %c0_62 = arith.constant 0 : index
    %c0_63 = arith.constant 0 : index
    %c0_64 = arith.constant 0 : index
    %65 = vector.load %arg7[%c0_62, %c0_63, %c0_64] : memref<3x160x128xbf16, #tpu.memory_space<vmem>>, vector<1x160x128xbf16>
    %66 = vector.shape_cast %65 : vector<1x160x128xbf16> to vector<160x128xbf16>
    %cst_65 = arith.constant dense<0.000000e+00> : vector<16x128xf32>
    %67 = tpu.matmul %64, %66, %cst_65 {dimension_numbers = #tpu.dot_dimension_numbers<[1], [0], [0], [1], [0, 0, 1, 1], [], []>} : vector<16x160xbf16>, vector<160x128xbf16>, vector<16x128xf32> -> vector<16x128xf32>
    %c1_66 = arith.constant 1 : index
    %c0_67 = arith.constant 0 : index
    %c0_68 = arith.constant 0 : index
    %68 = vector.load %arg7[%c1_66, %c0_67, %c0_68] : memref<3x160x128xbf16, #tpu.memory_space<vmem>>, vector<1x160x128xbf16>
    %69 = vector.shape_cast %68 : vector<1x160x128xbf16> to vector<160x128xbf16>
    %cst_69 = arith.constant dense<0.000000e+00> : vector<16x128xf32>
    %70 = tpu.matmul %64, %69, %cst_69 {dimension_numbers = #tpu.dot_dimension_numbers<[1], [0], [0], [1], [0, 0, 1, 1], [], []>} : vector<16x160xbf16>, vector<160x128xbf16>, vector<16x128xf32> -> vector<16x128xf32>
    %c2_70 = arith.constant 2 : index
    %c0_71 = arith.constant 0 : index
    %c0_72 = arith.constant 0 : index
    %71 = vector.load %arg7[%c2_70, %c0_71, %c0_72] : memref<3x160x128xbf16, #tpu.memory_space<vmem>>, vector<1x160x128xbf16>
    %72 = vector.shape_cast %71 : vector<1x160x128xbf16> to vector<160x128xbf16>
    %cst_73 = arith.constant dense<0.000000e+00> : vector<16x128xf32>
    %73 = tpu.matmul %64, %72, %cst_73 {dimension_numbers = #tpu.dot_dimension_numbers<[1], [0], [0], [1], [0, 0, 1, 1], [], []>} : vector<16x160xbf16>, vector<160x128xbf16>, vector<16x128xf32> -> vector<16x128xf32>
    %74 = tpu.concatenate %67, %70, %73 in 0 : vector<16x128xf32>, vector<16x128xf32>, vector<16x128xf32> -> vector<48x128xf32>
    %75 = arith.truncf %74 : vector<48x128xf32> to vector<48x128xbf16>
    %c0_74 = arith.constant 0 : index
    %c0_75 = arith.constant 0 : index
    %c0_76 = arith.constant 0 : index
    %76 = vector.load %arg8[%c0_74, %c0_75, %c0_76] : memref<2x2x48xbf16, #tpu.memory_space<vmem>>, vector<1x2x48xbf16>
    %77 = vector.shape_cast %76 : vector<1x2x48xbf16> to vector<2x48xbf16>
    %cst_77 = arith.constant dense<0.000000e+00> : vector<2x128xf32>
    %78 = tpu.matmul %77, %75, %cst_77 {dimension_numbers = #tpu.dot_dimension_numbers<[1], [0], [0], [1], [0, 0, 1, 1], [], []>} : vector<2x48xbf16>, vector<48x128xbf16>, vector<2x128xf32> -> vector<2x128xf32>
    %c1_78 = arith.constant 1 : index
    %c0_79 = arith.constant 0 : index
    %c0_80 = arith.constant 0 : index
    %79 = vector.load %arg8[%c1_78, %c0_79, %c0_80] : memref<2x2x48xbf16, #tpu.memory_space<vmem>>, vector<1x2x48xbf16>
    %80 = vector.shape_cast %79 : vector<1x2x48xbf16> to vector<2x48xbf16>
    %cst_81 = arith.constant dense<0.000000e+00> : vector<2x128xf32>
    %81 = tpu.matmul %80, %75, %cst_81 {dimension_numbers = #tpu.dot_dimension_numbers<[1], [0], [0], [1], [0, 0, 1, 1], [], []>} : vector<2x48xbf16>, vector<48x128xbf16>, vector<2x128xf32> -> vector<2x128xf32>
    %82 = tpu.concatenate %78, %81 in 1 : vector<2x128xf32>, vector<2x128xf32> -> vector<2x256xf32>
    %c0_82 = arith.constant 0 : index
    %c0_83 = arith.constant 0 : index
    %83 = vector.load %arg9[%c0_82, %c0_83] : memref<1x256xf32, #tpu.memory_space<vmem>>, vector<1x256xf32>
    %84 = vector.broadcast %83 : vector<1x256xf32> to vector<2x256xf32>
    %85 = arith.addf %82, %84 : vector<2x256xf32>
    %cst_84 = arith.constant 0.000000e+00 : f32
    %86 = vector.broadcast %cst_84 : f32 to vector<2x256xf32>
    %87 = arith.maximumf %85, %86 : vector<2x256xf32>
    %88 = arith.truncf %87 : vector<2x256xf32> to vector<2x256xbf16>
    %c0_85 = arith.constant 0 : index
    %c0_86 = arith.constant 0 : index
    %89 = vector.load %arg10[%c0_85, %c0_86] : memref<256x256xbf16, #tpu.memory_space<vmem>>, vector<256x256xbf16>
    %cst_87 = arith.constant dense<0.000000e+00> : vector<2x256xf32>
    %90 = tpu.matmul %88, %89, %cst_87 {dimension_numbers = #tpu.dot_dimension_numbers<[1], [0], [0], [1], [0, 0, 1, 1], [], []>} : vector<2x256xbf16>, vector<256x256xbf16>, vector<2x256xf32> -> vector<2x256xf32>
    %c0_88 = arith.constant 0 : index
    %c0_89 = arith.constant 0 : index
    %91 = vector.load %arg11[%c0_88, %c0_89] : memref<1x256xf32, #tpu.memory_space<vmem>>, vector<1x256xf32>
    %92 = vector.broadcast %91 : vector<1x256xf32> to vector<2x256xf32>
    %93 = arith.addf %90, %92 : vector<2x256xf32>
    %cst_90 = arith.constant 0.000000e+00 : f32
    %94 = vector.broadcast %cst_90 : f32 to vector<2x256xf32>
    %95 = arith.maximumf %93, %94 : vector<2x256xf32>
    %96 = arith.truncf %95 : vector<2x256xf32> to vector<2x256xbf16>
    %c0_91 = arith.constant 0 : index
    %c0_92 = arith.constant 0 : index
    %97 = vector.load %arg12[%c0_91, %c0_92] : memref<256x4xbf16, #tpu.memory_space<vmem>>, vector<256x4xbf16>
    %cst_93 = arith.constant dense<0.000000e+00> : vector<2x4xf32>
    %98 = tpu.matmul %96, %97, %cst_93 {dimension_numbers = #tpu.dot_dimension_numbers<[1], [0], [0], [1], [0, 0, 1, 1], [], []>} : vector<2x256xbf16>, vector<256x4xbf16>, vector<2x4xf32> -> vector<2x4xf32>
    %c0_94 = arith.constant 0 : index
    %c0_95 = arith.constant 0 : index
    %99 = vector.load %arg13[%c0_94, %c0_95] : memref<1x4xf32, #tpu.memory_space<vmem>>, vector<1x4xf32>
    %100 = vector.broadcast %99 : vector<1x4xf32> to vector<2x4xf32>
    %101 = arith.addf %98, %100 : vector<2x4xf32>
    %c0_96 = arith.constant 0 : index
    %c0_97 = arith.constant 0 : index
    %102 = vector.load %arg14[%c0_96, %c0_97] : memref<2x4xf32, #tpu.memory_space<vmem>>, vector<2x4xf32>
    tpu.vector_store %arg14[%c0_96, %c0_97], %101 {strides = array<i32>} : memref<2x4xf32, #tpu.memory_space<vmem>>, vector<2x4xf32>,
    return
  }
}

</mosaic_0001>

<llo_original>
// kernel: dqn_conv_forward.1
$region0: #{dqn_conv_forward.1}
  #allocation0 [shape = 'u32[]', space=smem, size = 0x4, offset = 0x4, fixed_abs, tag = 'smem constant byte address 0x4 - core index']
  #allocation1 [shape = 'u32[72,128]{1,0:T(1,128)}', space=vmem, size = 0x9000, scoped, tag = 'internal scratch']
  %s0 = inlined_call_operand.vmem [shape: f32[2,2,32,32], index: 0, kind: input, shape index: {}]
  %s1 = inlined_call_operand.vmem [shape: bf16[5,64,224], index: 1, kind: input, shape index: {}]
  %s2 = inlined_call_operand.vmem [shape: bf16[32,320], index: 2, kind: input, shape index: {}]
  %s3 = inlined_call_operand.vmem [shape: f32[1,224], index: 3, kind: input, shape index: {}]
  %s4 = inlined_call_operand.vmem [shape: bf16[5,224,160], index: 4, kind: input, shape index: {}]
  %s5 = inlined_call_operand.vmem [shape: bf16[16,160], index: 5, kind: input, shape index: {}]
  %s6 = inlined_call_operand.vmem [shape: f32[1,160], index: 6, kind: input, shape index: {}]
  %s7 = inlined_call_operand.vmem [shape: bf16[3,160,128], index: 7, kind: input, shape index: {}]
  %s8 = inlined_call_operand.vmem [shape: bf16[2,2,48], index: 8, kind: input, shape index: {}]
  %s9 = inlined_call_operand.vmem [shape: f32[1,256], index: 9, kind: input, shape index: {}]
  %s10 = inlined_call_operand.vmem [shape: bf16[256,256], index: 10, kind: input, shape index: {}]
  %s11 = inlined_call_operand.vmem [shape: f32[1,256], index: 11, kind: input, shape index: {}]
  %s12 = inlined_call_operand.vmem [shape: bf16[256,4], index: 12, kind: input, shape index: {}]
  %s13 = inlined_call_operand.vmem [shape: f32[1,4], index: 13, kind: input, shape index: {}]
  %s14 = inlined_call_operand.hbm [shape: f32[2,4], index: 14, kind: output, shape index: {}]
  %s15 = sld [smem:[#allocation0]]
  $region66: #{dqn_conv_forward.1} parent=0
    _
  %s17 = ssub.s32 1, %s15
  %s18 = scalar_select 0, %s17, %s15
  $region1: #{dqn_conv_forward.1} parent=0
    #allocation2 [shape = 'u8[1024]{0}', space=vmem, size = 0x400, scoped, tag = 'output window, operand 0, single buffered']
    #allocation3 [shape = 's32[1]{0}', space=sflag, size = 0x4, scoped, tag = 'scoped memory for dqn_conv_forward.1']
    %19 = vsyncpa [#allocation3], 0
    // Predicated region
    $region2: #{dqn_conv_forward.1} parent=1 // pred_check
      _
    $region3: #{dqn_conv_forward.1} parent=1 // pred_check_branch
      %21 = sbr.rel (0) target = $region5
    $region4: #{dqn_conv_forward.1} parent=1 // pred_region
      _
    $region5: #{dqn_conv_forward.1} parent=1 // pred_fallthru
      _
    // Predicated region
    $region6: #{dqn_conv_forward.1} parent=1 // pred_check
      _
    $region7: #{dqn_conv_forward.1} parent=1 // pred_check_branch
      %23 = sbr.rel (0) target = $region9
    $region8: #{dqn_conv_forward.1} parent=1 // pred_region
      _
    $region9: #{dqn_conv_forward.1} parent=1 // pred_fallthru
      _
    // Predicated region
    $region10: #{dqn_conv_forward.1} parent=1 // pred_check
      _
    $region11: #{dqn_conv_forward.1} parent=1 // pred_check_branch
      %25 = sbr.rel (0) target = $region13
    $region12: #{dqn_conv_forward.1} parent=1 // pred_region
      _
    $region13: #{dqn_conv_forward.1} parent=1 // pred_fallthru
      _
    // Predicated region
    $region14: #{dqn_conv_forward.1} parent=1 // pred_check
      _
    $region15: #{dqn_conv_forward.1} parent=1 // pred_check_branch
      %27 = sbr.rel (0) target = $region17
    $region16: #{dqn_conv_forward.1} parent=1 // pred_region
      _
    $region17: #{dqn_conv_forward.1} parent=1 // pred_fallthru
      _
    // Predicated region
    $region18: #{dqn_conv_forward.1} parent=1 // pred_check
      _
    $region19: #{dqn_conv_forward.1} parent=1 // pred_check_branch
      %29 = sbr.rel (0) target = $region21
    $region20: #{dqn_conv_forward.1} parent=1 // pred_region
      _
    $region21: #{dqn_conv_forward.1} parent=1 // pred_fallthru
      _
    // Predicated region
    $region22: #{dqn_conv_forward.1} parent=1 // pred_check
      _
    $region23: #{dqn_conv_forward.1} parent=1 // pred_check_branch
      %31 = sbr.rel (0) target = $region25
    $region24: #{dqn_conv_forward.1} parent=1 // pred_region
      _
    $region25: #{dqn_conv_forward.1} parent=1 // pred_fallthru
      _
    // Predicated region
    $region26: #{dqn_conv_forward.1} parent=1 // pred_check
      _
    $region27: #{dqn_conv_forward.1} parent=1 // pred_check_branch
      %33 = sbr.rel (0) target = $region29
    $region28: #{dqn_conv_forward.1} parent=1 // pred_region
      _
    $region29: #{dqn_conv_forward.1} parent=1 // pred_fallthru
      _
    // Predicated region
    $region30: #{dqn_conv_forward.1} parent=1 // pred_check
      _
    $region31: #{dqn_conv_forward.1} parent=1 // pred_check_branch
      %35 = sbr.rel (0) target = $region33
    $region32: #{dqn_conv_forward.1} parent=1 // pred_region
      _
    $region33: #{dqn_conv_forward.1} parent=1 // pred_fallthru
      _
    // Predicated region
    $region34: #{dqn_conv_forward.1} parent=1 // pred_check
      _
    $region35: #{dqn_conv_forward.1} parent=1 // pred_check_branch
      %37 = sbr.rel (0) target = $region37
    $region36: #{dqn_conv_forward.1} parent=1 // pred_region
      _
    $region37: #{dqn_conv_forward.1} parent=1 // pred_fallthru
      _
    // Predicated region
    $region38: #{dqn_conv_forward.1} parent=1 // pred_check
      _
    $region39: #{dqn_conv_forward.1} parent=1 // pred_check_branch
      %39 = sbr.rel (0) target = $region41
    $region40: #{dqn_conv_forward.1} parent=1 // pred_region
      _
    $region41: #{dqn_conv_forward.1} parent=1 // pred_fallthru
      _
    // Predicated region
    $region42: #{dqn_conv_forward.1} parent=1 // pred_check
      _
    $region43: #{dqn_conv_forward.1} parent=1 // pred_check_branch
      %41 = sbr.rel (0) target = $region45
    $region44: #{dqn_conv_forward.1} parent=1 // pred_region
      _
    $region45: #{dqn_conv_forward.1} parent=1 // pred_fallthru
      _
    // Predicated region
    $region46: #{dqn_conv_forward.1} parent=1 // pred_check
      _
    $region47: #{dqn_conv_forward.1} parent=1 // pred_check_branch
      %43 = sbr.rel (0) target = $region49
    $region48: #{dqn_conv_forward.1} parent=1 // pred_region
      _
    $region49: #{dqn_conv_forward.1} parent=1 // pred_fallthru
      _
    // Predicated region
    $region50: #{dqn_conv_forward.1} parent=1 // pred_check
      _
    $region51: #{dqn_conv_forward.1} parent=1 // pred_check_branch
      %45 = sbr.rel (0) target = $region53
    $region52: #{dqn_conv_forward.1} parent=1 // pred_region
      _
    $region53: #{dqn_conv_forward.1} parent=1 // pred_fallthru
      _
    // Predicated region
    $region54: #{dqn_conv_forward.1} parent=1 // pred_check
      _
    $region55: #{dqn_conv_forward.1} parent=1 // pred_check_branch
      %47 = sbr.rel (0) target = $region57
    $region56: #{dqn_conv_forward.1} parent=1 // pred_region
      _
    $region57: #{dqn_conv_forward.1} parent=1 // pred_fallthru
      _
    %v49 = vld [vmem:[%s0] sm:$0xff]
    %v50 = vld [vmem:[%s0 + $0x8] sm:$0xff]
    %v51 = vld [vmem:[%s0 + $0x10] sm:$0xff]
    %v52 = vld [vmem:[%s0 + $0x18] sm:$0xff]
    %v53 = vpack.c.bf16 %v49, %v49
    %v54 = vpack.c.bf16 %v50, %v50
    %v55 = vpack.c.bf16 %v51, %v51
    %v56 = vpack.c.bf16 %v52, %v52
    %s57 = scalar_lea.vmem %s0, 32
    %v58 = vld [vmem:[%s57] sm:$0xff]
    %v59 = vld [vmem:[%s57 + $0x8] sm:$0xff]
    %v60 = vld [vmem:[%s57 + $0x10] sm:$0xff]
    %v61 = vld [vmem:[%s57 + $0x18] sm:$0xff]
    %v62 = vpack.c.bf16 %v58, %v58
    %v63 = vpack.c.bf16 %v59, %v59
    %v64 = vpack.c.bf16 %v60, %v60
    %v65 = vpack.c.bf16 %v61, %v61
    %v70 = vunpack.c.l.b16 %v53
    %v71 = vunpack.c.l.b16 %v54
    %v72 = vunpack.c.l.b16 %v55
    %v73 = vunpack.c.l.b16 %v56
    %v74 = vpack.c.b16 %v71, %v70
    %v75 = vpack.c.b16 %v73, %v72
    %v80 = vunpack.c.l.b16 %v62
    %v81 = vunpack.c.l.b16 %v63
    %v82 = vunpack.c.l.b16 %v64
    %v83 = vunpack.c.l.b16 %v65
    %v84 = vpack.c.b16 %v81, %v80
    %v85 = vpack.c.b16 %v83, %v82
    %86 = vrot.lane.b32.xlu0 %v84, 32
    %v87 = vpop.permute.xlu0 %86
    %88 = vrot.lane.b32.xlu0 %v85, 32
    %v89 = vpop.permute.xlu0 %88
    %vm90 = vcmask 261120
    %v93 = vsel %vm90, %v74, %v87
    %v96 = vsel %vm90, %v75, %v89
    %s97 = scalar_lea.vmem %s0, 64
    %v98 = vld [vmem:[%s97] sm:$0xff]
    %v99 = vld [vmem:[%s97 + $0x8] sm:$0xff]
    %v100 = vld [vmem:[%s97 + $0x10] sm:$0xff]
    %v101 = vld [vmem:[%s97 + $0x18] sm:$0xff]
    %v102 = vpack.c.bf16 %v98, %v98
    %v103 = vpack.c.bf16 %v99, %v99
    %v104 = vpack.c.bf16 %v100, %v100
    %v105 = vpack.c.bf16 %v101, %v101
    %s106 = scalar_lea.vmem %s0, 96
    %v107 = vld [vmem:[%s106] sm:$0xff]
    %v108 = vld [vmem:[%s106 + $0x8] sm:$0xff]
    %v109 = vld [vmem:[%s106 + $0x10] sm:$0xff]
    %v110 = vld [vmem:[%s106 + $0x18] sm:$0xff]
    %v111 = vpack.c.bf16 %v107, %v107
    %v112 = vpack.c.bf16 %v108, %v108
    %v113 = vpack.c.bf16 %v109, %v109
    %v114 = vpack.c.bf16 %v110, %v110
    %v119 = vunpack.c.l.b16 %v102
    %v120 = vunpack.c.l.b16 %v103
    %v121 = vunpack.c.l.b16 %v104
    %v122 = vunpack.c.l.b16 %v105
    %v123 = vpack.c.b16 %v120, %v119
    %v124 = vpack.c.b16 %v122, %v121
    %v129 = vunpack.c.l.b16 %v111
    %v130 = vunpack.c.l.b16 %v112
    %v131 = vunpack.c.l.b16 %v113
    %v132 = vunpack.c.l.b16 %v114
    %v133 = vpack.c.b16 %v130, %v129
    %v134 = vpack.c.b16 %v132, %v131
    %135 = vrot.lane.b32.xlu0 %v133, 32
    %v136 = vpop.permute.xlu0 %135
    %137 = vrot.lane.b32.xlu0 %v134, 32
    %v138 = vpop.permute.xlu0 %137
    %v141 = vsel %vm90, %v123, %v136
    %v144 = vsel %vm90, %v124, %v138
    %v145 = vld [vmem:[%s1] sm:$0xff]
    %v146 = vld [vmem:[%s1 + $0x8] sm:$0xff]
    %v147 = vld [vmem:[%s1 + $0x10] sm:$0xff]
    %v148 = vld [vmem:[%s1 + $0x18] sm:$0xff]
    %v149 = vld [vmem:[%s1 + $0x20] sm:$0xff]
    %v150 = vld [vmem:[%s1 + $0x28] sm:$0xff]
    %v151 = vld [vmem:[%s1 + $0x30] sm:$0xff]
    %v152 = vld [vmem:[%s1 + $0x38] sm:$0xff]
    %v161 = vunpack.c.l.b16 %v145
    %v162 = vunpack.c.h.b16 %v145
    %v163 = vunpack.c.l.b16 %v146
    %v164 = vunpack.c.h.b16 %v146
    %v165 = vunpack.c.l.b16 %v147
    %v166 = vunpack.c.h.b16 %v147
    %v167 = vunpack.c.l.b16 %v148
    %v168 = vunpack.c.h.b16 %v148
    %v169 = vunpack.c.l.b16 %v149
    %v170 = vunpack.c.h.b16 %v149
    %v171 = vunpack.c.l.b16 %v150
    %v172 = vunpack.c.h.b16 %v150
    %v173 = vunpack.c.l.b16 %v151
    %v174 = vunpack.c.h.b16 %v151
    %v175 = vunpack.c.l.b16 %v152
    %v176 = vunpack.c.h.b16 %v152
    %v177 = vpack.c.b16 %v163, %v161
    %v178 = vpack.c.b16 %v164, %v162
    %v179 = vpack.c.b16 %v167, %v165
    %v180 = vpack.c.b16 %v168, %v166
    %v181 = vpack.c.b16 %v171, %v169
    %v182 = vpack.c.b16 %v172, %v170
    %v183 = vpack.c.b16 %v175, %v173
    %v184 = vpack.c.b16 %v176, %v174
    %vm193 = vcmask 523264
    %v194 = vsel %vm193, %v93, 0
    %v196 = vsel %vm193, %v96, 0
    %v198 = vsel %vm193, %v141, 0
    %v200 = vsel %vm193, %v144, 0
    %202 = vmatpush.bf16.msra.mxu0 0
    %203 = vmatpush.bf16.msra.mxu0 0
    %204 = vmatpush.bf16.msra.mxu0 0
    %205 = vmatpush.bf16.msra.mxu0 0
    %206 = vmatpush.bf16.msra.mxu0 %v183
    %207 = vmatpush.bf16.msra.mxu0 %v181
    %208 = vmatpush.bf16.msra.mxu0 %v179
    %209 = vmatpush.bf16.msra.mxu0 %v177
    %210 = vmatmul.bf16.gmra.mxu0 %v194
    %v211 = vpop.f32.mrf.mxu0
    %v212 = vadd.f32 0.0, %v211
    %v213 = vpop.f32.mrf.mxu0
    %v214 = vadd.f32 0.0, %v213
    %215 = vmatmul.bf16.gmra.mxu0 %v196
    %v216 = vpop.f32.mrf.mxu0
    %v217 = vadd.f32 0.0, %v216
    %v218 = vpop.f32.mrf.mxu0
    %v219 = vadd.f32 0.0, %v218
    %220 = vmatmul.bf16.gmra.mxu0 %v198
    %v221 = vpop.f32.mrf.mxu0
    %v222 = vadd.f32 0.0, %v221
    %v223 = vpop.f32.mrf.mxu0
    %v224 = vadd.f32 0.0, %v223
    %225 = vmatmul.bf16.gmra.mxu0 %v200
    %v226 = vpop.f32.mrf.mxu0
    %v227 = vadd.f32 0.0, %v226
    %v228 = vpop.f32.mrf.mxu0
    %v229 = vadd.f32 0.0, %v228
    %230 = vdwg.mxu0
    %231 = vmatpush.bf16.msra.mxu0 0
    %232 = vmatpush.bf16.msra.mxu0 0
    %233 = vmatpush.bf16.msra.mxu0 0
    %234 = vmatpush.bf16.msra.mxu0 0
    %235 = vmatpush.bf16.msra.mxu0 %v184
    %236 = vmatpush.bf16.msra.mxu0 %v182
    %237 = vmatpush.bf16.msra.mxu0 %v180
    %238 = vmatpush.bf16.msra.mxu0 %v178
    %239 = vmatmul.bf16.gmra.mxu0 %v194
    %v240 = vpop.f32.mrf.mxu0
    %v241 = vadd.f32 0.0, %v240
    %v242 = vpop.f32.mrf.mxu0
    %v243 = vadd.f32 0.0, %v242
    %244 = vmatmul.bf16.gmra.mxu0 %v196
    %v245 = vpop.f32.mrf.mxu0
    %v246 = vadd.f32 0.0, %v245
    %v247 = vpop.f32.mrf.mxu0
    %v248 = vadd.f32 0.0, %v247
    %249 = vmatmul.bf16.gmra.mxu0 %v198
    %v250 = vpop.f32.mrf.mxu0
    %v251 = vadd.f32 0.0, %v250
    %v252 = vpop.f32.mrf.mxu0
    %v253 = vadd.f32 0.0, %v252
    %254 = vmatmul.bf16.gmra.mxu0 %v200
    %v255 = vpop.f32.mrf.mxu0
    %v256 = vadd.f32 0.0, %v255
    %v257 = vpop.f32.mrf.mxu0
    %v258 = vadd.f32 0.0, %v257
    %259 = vdwg.mxu0
    %s260 = scalar_lea.vmem %s1, 64
    %v261 = vld [vmem:[%s260] sm:$0xff]
    %v262 = vld [vmem:[%s260 + $0x8] sm:$0xff]
    %v263 = vld [vmem:[%s260 + $0x10] sm:$0xff]
    %v264 = vld [vmem:[%s260 + $0x18] sm:$0xff]
    %v265 = vld [vmem:[%s260 + $0x20] sm:$0xff]
    %v266 = vld [vmem:[%s260 + $0x28] sm:$0xff]
    %v267 = vld [vmem:[%s260 + $0x30] sm:$0xff]
    %v268 = vld [vmem:[%s260 + $0x38] sm:$0xff]
    %v277 = vunpack.c.l.b16 %v261
    %v278 = vunpack.c.h.b16 %v261
    %v279 = vunpack.c.l.b16 %v262
    %v280 = vunpack.c.h.b16 %v262
    %v281 = vunpack.c.l.b16 %v263
    %v282 = vunpack.c.h.b16 %v263
    %v283 = vunpack.c.l.b16 %v264
    %v284 = vunpack.c.h.b16 %v264
    %v285 = vunpack.c.l.b16 %v265
    %v286 = vunpack.c.h.b16 %v265
    %v287 = vunpack.c.l.b16 %v266
    %v288 = vunpack.c.h.b16 %v266
    %v289 = vunpack.c.l.b16 %v267
    %v290 = vunpack.c.h.b16 %v267
    %v291 = vunpack.c.l.b16 %v268
    %v292 = vunpack.c.h.b16 %v268
    %v293 = vpack.c.b16 %v279, %v277
    %v294 = vpack.c.b16 %v280, %v278
    %v295 = vpack.c.b16 %v283, %v281
    %v296 = vpack.c.b16 %v284, %v282
    %v297 = vpack.c.b16 %v287, %v285
    %v298 = vpack.c.b16 %v288, %v286
    %v299 = vpack.c.b16 %v291, %v289
    %v300 = vpack.c.b16 %v292, %v290
    %309 = vmatpush.bf16.msra.mxu0 0
    %310 = vmatpush.bf16.msra.mxu0 0
    %311 = vmatpush.bf16.msra.mxu0 0
    %312 = vmatpush.bf16.msra.mxu0 0
    %313 = vmatpush.bf16.msra.mxu0 %v299
    %314 = vmatpush.bf16.msra.mxu0 %v297
    %315 = vmatpush.bf16.msra.mxu0 %v295
    %316 = vmatpush.bf16.msra.mxu0 %v293
    %317 = vmatmul.bf16.gmra.mxu0 %v194
    %v318 = vpop.f32.mrf.mxu0
    %v319 = vadd.f32 0.0, %v318
    %v320 = vpop.f32.mrf.mxu0
    %v321 = vadd.f32 0.0, %v320
    %322 = vmatmul.bf16.gmra.mxu0 %v196
    %v323 = vpop.f32.mrf.mxu0
    %v324 = vadd.f32 0.0, %v323
    %v325 = vpop.f32.mrf.mxu0
    %v326 = vadd.f32 0.0, %v325
    %327 = vmatmul.bf16.gmra.mxu0 %v198
    %v328 = vpop.f32.mrf.mxu0
    %v329 = vadd.f32 0.0, %v328
    %v330 = vpop.f32.mrf.mxu0
    %v331 = vadd.f32 0.0, %v330
    %332 = vmatmul.bf16.gmra.mxu0 %v200
    %v333 = vpop.f32.mrf.mxu0
    %v334 = vadd.f32 0.0, %v333
    %v335 = vpop.f32.mrf.mxu0
    %v336 = vadd.f32 0.0, %v335
    %337 = vdwg.mxu0
    %338 = vmatpush.bf16.msra.mxu0 0
    %339 = vmatpush.bf16.msra.mxu0 0
    %340 = vmatpush.bf16.msra.mxu0 0
    %341 = vmatpush.bf16.msra.mxu0 0
    %342 = vmatpush.bf16.msra.mxu0 %v300
    %343 = vmatpush.bf16.msra.mxu0 %v298
    %344 = vmatpush.bf16.msra.mxu0 %v296
    %345 = vmatpush.bf16.msra.mxu0 %v294
    %346 = vmatmul.bf16.gmra.mxu0 %v194
    %v347 = vpop.f32.mrf.mxu0
    %v348 = vadd.f32 0.0, %v347
    %v349 = vpop.f32.mrf.mxu0
    %v350 = vadd.f32 0.0, %v349
    %351 = vmatmul.bf16.gmra.mxu0 %v196
    %v352 = vpop.f32.mrf.mxu0
    %v353 = vadd.f32 0.0, %v352
    %v354 = vpop.f32.mrf.mxu0
    %v355 = vadd.f32 0.0, %v354
    %356 = vmatmul.bf16.gmra.mxu0 %v198
    %v357 = vpop.f32.mrf.mxu0
    %v358 = vadd.f32 0.0, %v357
    %v359 = vpop.f32.mrf.mxu0
    %v360 = vadd.f32 0.0, %v359
    %361 = vmatmul.bf16.gmra.mxu0 %v200
    %v362 = vpop.f32.mrf.mxu0
    %v363 = vadd.f32 0.0, %v362
    %v364 = vpop.f32.mrf.mxu0
    %v365 = vadd.f32 0.0, %v364
    %366 = vdwg.mxu0
    %s367 = scalar_lea.vmem %s1, 128
    %v368 = vld [vmem:[%s367] sm:$0xff]
    %v369 = vld [vmem:[%s367 + $0x8] sm:$0xff]
    %v370 = vld [vmem:[%s367 + $0x10] sm:$0xff]
    %v371 = vld [vmem:[%s367 + $0x18] sm:$0xff]
    %v372 = vld [vmem:[%s367 + $0x20] sm:$0xff]
    %v373 = vld [vmem:[%s367 + $0x28] sm:$0xff]
    %v374 = vld [vmem:[%s367 + $0x30] sm:$0xff]
    %v375 = vld [vmem:[%s367 + $0x38] sm:$0xff]
    %v384 = vunpack.c.l.b16 %v368
    %v385 = vunpack.c.h.b16 %v368
    %v386 = vunpack.c.l.b16 %v369
    %v387 = vunpack.c.h.b16 %v369
    %v388 = vunpack.c.l.b16 %v370
    %v389 = vunpack.c.h.b16 %v370
    %v390 = vunpack.c.l.b16 %v371
    %v391 = vunpack.c.h.b16 %v371
    %v392 = vunpack.c.l.b16 %v372
    %v393 = vunpack.c.h.b16 %v372
    %v394 = vunpack.c.l.b16 %v373
    %v395 = vunpack.c.h.b16 %v373
    %v396 = vunpack.c.l.b16 %v374
    %v397 = vunpack.c.h.b16 %v374
    %v398 = vunpack.c.l.b16 %v375
    %v399 = vunpack.c.h.b16 %v375
    %v400 = vpack.c.b16 %v386, %v384
    %v401 = vpack.c.b16 %v387, %v385
    %v402 = vpack.c.b16 %v390, %v388
    %v403 = vpack.c.b16 %v391, %v389
    %v404 = vpack.c.b16 %v394, %v392
    %v405 = vpack.c.b16 %v395, %v393
    %v406 = vpack.c.b16 %v398, %v396
    %v407 = vpack.c.b16 %v399, %v397
    %416 = vmatpush.bf16.msra.mxu0 0
    %417 = vmatpush.bf16.msra.mxu0 0
    %418 = vmatpush.bf16.msra.mxu0 0
    %419 = vmatpush.bf16.msra.mxu0 0
    %420 = vmatpush.bf16.msra.mxu0 %v406
    %421 = vmatpush.bf16.msra.mxu0 %v404
    %422 = vmatpush.bf16.msra.mxu0 %v402
    %423 = vmatpush.bf16.msra.mxu0 %v400
    %424 = vmatmul.bf16.gmra.mxu0 %v194
    %v425 = vpop.f32.mrf.mxu0
    %v426 = vadd.f32 0.0, %v425
    %v427 = vpop.f32.mrf.mxu0
    %v428 = vadd.f32 0.0, %v427
    %429 = vmatmul.bf16.gmra.mxu0 %v196
    %v430 = vpop.f32.mrf.mxu0
    %v431 = vadd.f32 0.0, %v430
    %v432 = vpop.f32.mrf.mxu0
    %v433 = vadd.f32 0.0, %v432
    %434 = vmatmul.bf16.gmra.mxu0 %v198
    %v435 = vpop.f32.mrf.mxu0
    %v436 = vadd.f32 0.0, %v435
    %v437 = vpop.f32.mrf.mxu0
    %v438 = vadd.f32 0.0, %v437
    %439 = vmatmul.bf16.gmra.mxu0 %v200
    %v440 = vpop.f32.mrf.mxu0
    %v441 = vadd.f32 0.0, %v440
    %v442 = vpop.f32.mrf.mxu0
    %v443 = vadd.f32 0.0, %v442
    %444 = vdwg.mxu0
    %445 = vmatpush.bf16.msra.mxu0 0
    %446 = vmatpush.bf16.msra.mxu0 0
    %447 = vmatpush.bf16.msra.mxu0 0
    %448 = vmatpush.bf16.msra.mxu0 0
    %449 = vmatpush.bf16.msra.mxu0 %v407
    %450 = vmatpush.bf16.msra.mxu0 %v405
    %451 = vmatpush.bf16.msra.mxu0 %v403
    %452 = vmatpush.bf16.msra.mxu0 %v401
    %453 = vmatmul.bf16.gmra.mxu0 %v194
    %v454 = vpop.f32.mrf.mxu0
    %v455 = vadd.f32 0.0, %v454
    %v456 = vpop.f32.mrf.mxu0
    %v457 = vadd.f32 0.0, %v456
    %458 = vmatmul.bf16.gmra.mxu0 %v196
    %v459 = vpop.f32.mrf.mxu0
    %v460 = vadd.f32 0.0, %v459
    %v461 = vpop.f32.mrf.mxu0
    %v462 = vadd.f32 0.0, %v461
    %463 = vmatmul.bf16.gmra.mxu0 %v198
    %v464 = vpop.f32.mrf.mxu0
    %v465 = vadd.f32 0.0, %v464
    %v466 = vpop.f32.mrf.mxu0
    %v467 = vadd.f32 0.0, %v466
    %468 = vmatmul.bf16.gmra.mxu0 %v200
    %v469 = vpop.f32.mrf.mxu0
    %v470 = vadd.f32 0.0, %v469
    %v471 = vpop.f32.mrf.mxu0
    %v472 = vadd.f32 0.0, %v471
    %473 = vdwg.mxu0
    %s474 = scalar_lea.vmem %s1, 192
    %v475 = vld [vmem:[%s474] sm:$0xff]
    %v476 = vld [vmem:[%s474 + $0x8] sm:$0xff]
    %v477 = vld [vmem:[%s474 + $0x10] sm:$0xff]
    %v478 = vld [vmem:[%s474 + $0x18] sm:$0xff]
    %v479 = vld [vmem:[%s474 + $0x20] sm:$0xff]
    %v480 = vld [vmem:[%s474 + $0x28] sm:$0xff]
    %v481 = vld [vmem:[%s474 + $0x30] sm:$0xff]
    %v482 = vld [vmem:[%s474 + $0x38] sm:$0xff]
    %v491 = vunpack.c.l.b16 %v475
    %v492 = vunpack.c.h.b16 %v475
    %v493 = vunpack.c.l.b16 %v476
    %v494 = vunpack.c.h.b16 %v476
    %v495 = vunpack.c.l.b16 %v477
    %v496 = vunpack.c.h.b16 %v477
    %v497 = vunpack.c.l.b16 %v478
    %v498 = vunpack.c.h.b16 %v478
    %v499 = vunpack.c.l.b16 %v479
    %v500 = vunpack.c.h.b16 %v479
    %v501 = vunpack.c.l.b16 %v480
    %v502 = vunpack.c.h.b16 %v480
    %v503 = vunpack.c.l.b16 %v481
    %v504 = vunpack.c.h.b16 %v481
    %v505 = vunpack.c.l.b16 %v482
    %v506 = vunpack.c.h.b16 %v482
    %v507 = vpack.c.b16 %v493, %v491
    %v508 = vpack.c.b16 %v494, %v492
    %v509 = vpack.c.b16 %v497, %v495
    %v510 = vpack.c.b16 %v498, %v496
    %v511 = vpack.c.b16 %v501, %v499
    %v512 = vpack.c.b16 %v502, %v500
    %v513 = vpack.c.b16 %v505, %v503
    %v514 = vpack.c.b16 %v506, %v504
    %523 = vmatpush.bf16.msra.mxu0 0
    %524 = vmatpush.bf16.msra.mxu0 0
    %525 = vmatpush.bf16.msra.mxu0 0
    %526 = vmatpush.bf16.msra.mxu0 0
    %527 = vmatpush.bf16.msra.mxu0 %v513
    %528 = vmatpush.bf16.msra.mxu0 %v511
    %529 = vmatpush.bf16.msra.mxu0 %v509
    %530 = vmatpush.bf16.msra.mxu0 %v507
    %531 = vmatmul.bf16.gmra.mxu0 %v194
    %v532 = vpop.f32.mrf.mxu0
    %v533 = vadd.f32 0.0, %v532
    %v534 = vpop.f32.mrf.mxu0
    %v535 = vadd.f32 0.0, %v534
    %536 = vmatmul.bf16.gmra.mxu0 %v196
    %v537 = vpop.f32.mrf.mxu0
    %v538 = vadd.f32 0.0, %v537
    %v539 = vpop.f32.mrf.mxu0
    %v540 = vadd.f32 0.0, %v539
    %541 = vmatmul.bf16.gmra.mxu0 %v198
    %v542 = vpop.f32.mrf.mxu0
    %v543 = vadd.f32 0.0, %v542
    %v544 = vpop.f32.mrf.mxu0
    %v545 = vadd.f32 0.0, %v544
    %546 = vmatmul.bf16.gmra.mxu0 %v200
    %v547 = vpop.f32.mrf.mxu0
    %v548 = vadd.f32 0.0, %v547
    %v549 = vpop.f32.mrf.mxu0
    %v550 = vadd.f32 0.0, %v549
    %551 = vdwg.mxu0
    %552 = vmatpush.bf16.msra.mxu0 0
    %553 = vmatpush.bf16.msra.mxu0 0
    %554 = vmatpush.bf16.msra.mxu0 0
    %555 = vmatpush.bf16.msra.mxu0 0
    %556 = vmatpush.bf16.msra.mxu0 %v514
    %557 = vmatpush.bf16.msra.mxu0 %v512
    %558 = vmatpush.bf16.msra.mxu0 %v510
    %559 = vmatpush.bf16.msra.mxu0 %v508
    %560 = vmatmul.bf16.gmra.mxu0 %v194
    %v561 = vpop.f32.mrf.mxu0
    %v562 = vadd.f32 0.0, %v561
    %v563 = vpop.f32.mrf.mxu0
    %v564 = vadd.f32 0.0, %v563
    %565 = vmatmul.bf16.gmra.mxu0 %v196
    %v566 = vpop.f32.mrf.mxu0
    %v567 = vadd.f32 0.0, %v566
    %v568 = vpop.f32.mrf.mxu0
    %v569 = vadd.f32 0.0, %v568
    %570 = vmatmul.bf16.gmra.mxu0 %v198
    %v571 = vpop.f32.mrf.mxu0
    %v572 = vadd.f32 0.0, %v571
    %v573 = vpop.f32.mrf.mxu0
    %v574 = vadd.f32 0.0, %v573
    %575 = vmatmul.bf16.gmra.mxu0 %v200
    %v576 = vpop.f32.mrf.mxu0
    %v577 = vadd.f32 0.0, %v576
    %v578 = vpop.f32.mrf.mxu0
    %v579 = vadd.f32 0.0, %v578
    %580 = vdwg.mxu0
    %s581 = scalar_lea.vmem %s1, 256
    %v582 = vld [vmem:[%s581] sm:$0xff]
    %v583 = vld [vmem:[%s581 + $0x8] sm:$0xff]
    %v584 = vld [vmem:[%s581 + $0x10] sm:$0xff]
    %v585 = vld [vmem:[%s581 + $0x18] sm:$0xff]
    %v586 = vld [vmem:[%s581 + $0x20] sm:$0xff]
    %v587 = vld [vmem:[%s581 + $0x28] sm:$0xff]
    %v588 = vld [vmem:[%s581 + $0x30] sm:$0xff]
    %v589 = vld [vmem:[%s581 + $0x38] sm:$0xff]
    %v598 = vunpack.c.l.b16 %v582
    %v599 = vunpack.c.h.b16 %v582
    %v600 = vunpack.c.l.b16 %v583
    %v601 = vunpack.c.h.b16 %v583
    %v602 = vunpack.c.l.b16 %v584
    %v603 = vunpack.c.h.b16 %v584
    %v604 = vunpack.c.l.b16 %v585
    %v605 = vunpack.c.h.b16 %v585
    %v606 = vunpack.c.l.b16 %v586
    %v607 = vunpack.c.h.b16 %v586
    %v608 = vunpack.c.l.b16 %v587
    %v609 = vunpack.c.h.b16 %v587
    %v610 = vunpack.c.l.b16 %v588
    %v611 = vunpack.c.h.b16 %v588
    %v612 = vunpack.c.l.b16 %v589
    %v613 = vunpack.c.h.b16 %v589
    %v614 = vpack.c.b16 %v600, %v598
    %v615 = vpack.c.b16 %v601, %v599
    %v616 = vpack.c.b16 %v604, %v602
    %v617 = vpack.c.b16 %v605, %v603
    %v618 = vpack.c.b16 %v608, %v606
    %v619 = vpack.c.b16 %v609, %v607
    %v620 = vpack.c.b16 %v612, %v610
    %v621 = vpack.c.b16 %v613, %v611
    %630 = vmatpush.bf16.msra.mxu0 0
    %631 = vmatpush.bf16.msra.mxu0 0
    %632 = vmatpush.bf16.msra.mxu0 0
    %633 = vmatpush.bf16.msra.mxu0 0
    %634 = vmatpush.bf16.msra.mxu0 %v620
    %635 = vmatpush.bf16.msra.mxu0 %v618
    %636 = vmatpush.bf16.msra.mxu0 %v616
    %637 = vmatpush.bf16.msra.mxu0 %v614
    %638 = vmatmul.bf16.gmra.mxu0 %v194
    %v639 = vpop.f32.mrf.mxu0
    %v640 = vadd.f32 0.0, %v639
    %v641 = vpop.f32.mrf.mxu0
    %v642 = vadd.f32 0.0, %v641
    %643 = vmatmul.bf16.gmra.mxu0 %v196
    %v644 = vpop.f32.mrf.mxu0
    %v645 = vadd.f32 0.0, %v644
    %v646 = vpop.f32.mrf.mxu0
    %v647 = vadd.f32 0.0, %v646
    %648 = vmatmul.bf16.gmra.mxu0 %v198
    %v649 = vpop.f32.mrf.mxu0
    %v650 = vadd.f32 0.0, %v649
    %v651 = vpop.f32.mrf.mxu0
    %v652 = vadd.f32 0.0, %v651
    %653 = vmatmul.bf16.gmra.mxu0 %v200
    %v654 = vpop.f32.mrf.mxu0
    %v655 = vadd.f32 0.0, %v654
    %v656 = vpop.f32.mrf.mxu0
    %v657 = vadd.f32 0.0, %v656
    %658 = vdwg.mxu0
    %659 = vmatpush.bf16.msra.mxu0 0
    %660 = vmatpush.bf16.msra.mxu0 0
    %661 = vmatpush.bf16.msra.mxu0 0
    %662 = vmatpush.bf16.msra.mxu0 0
    %663 = vmatpush.bf16.msra.mxu0 %v621
    %664 = vmatpush.bf16.msra.mxu0 %v619
    %665 = vmatpush.bf16.msra.mxu0 %v617
    %666 = vmatpush.bf16.msra.mxu0 %v615
    %667 = vmatmul.bf16.gmra.mxu0 %v194
    %v668 = vpop.f32.mrf.mxu0
    %v669 = vadd.f32 0.0, %v668
    %v670 = vpop.f32.mrf.mxu0
    %v671 = vadd.f32 0.0, %v670
    %672 = vmatmul.bf16.gmra.mxu0 %v196
    %v673 = vpop.f32.mrf.mxu0
    %v674 = vadd.f32 0.0, %v673
    %v675 = vpop.f32.mrf.mxu0
    %v676 = vadd.f32 0.0, %v675
    %677 = vmatmul.bf16.gmra.mxu0 %v198
    %v678 = vpop.f32.mrf.mxu0
    %v679 = vadd.f32 0.0, %v678
    %v680 = vpop.f32.mrf.mxu0
    %v681 = vadd.f32 0.0, %v680
    %682 = vmatmul.bf16.gmra.mxu0 %v200
    %v683 = vpop.f32.mrf.mxu0
    %v684 = vadd.f32 0.0, %v683
    %v685 = vpop.f32.mrf.mxu0
    %v686 = vadd.f32 0.0, %v685
    %687 = vdwg.mxu0
    %v688 = vpack.c.bf16 %v214, %v212
    %v689 = vpack.c.bf16 %v243, %v241
    %v690 = vpack.c.bf16 %v219, %v217
    %v691 = vpack.c.bf16 %v248, %v246
    %v692 = vpack.c.bf16 %v224, %v222
    %v693 = vpack.c.bf16 %v253, %v251
    %v694 = vpack.c.bf16 %v229, %v227
    %v695 = vpack.c.bf16 %v258, %v256
    %v696 = vpack.c.bf16 %v321, %v319
    %v697 = vpack.c.bf16 %v350, %v348
    %v698 = vpack.c.bf16 %v326, %v324
    %v699 = vpack.c.bf16 %v355, %v353
    %v700 = vpack.c.bf16 %v331, %v329
    %v701 = vpack.c.bf16 %v360, %v358
    %v702 = vpack.c.bf16 %v336, %v334
    %v703 = vpack.c.bf16 %v365, %v363
    %v704 = vpack.c.bf16 %v428, %v426
    %v705 = vpack.c.bf16 %v457, %v455
    %v706 = vpack.c.bf16 %v433, %v431
    %v707 = vpack.c.bf16 %v462, %v460
    %v708 = vpack.c.bf16 %v438, %v436
    %v709 = vpack.c.bf16 %v467, %v465
    %v710 = vpack.c.bf16 %v443, %v441
    %v711 = vpack.c.bf16 %v472, %v470
    %v712 = vpack.c.bf16 %v535, %v533
    %v713 = vpack.c.bf16 %v564, %v562
    %v714 = vpack.c.bf16 %v540, %v538
    %v715 = vpack.c.bf16 %v569, %v567
    %v716 = vpack.c.bf16 %v545, %v543
    %v717 = vpack.c.bf16 %v574, %v572
    %v718 = vpack.c.bf16 %v550, %v548
    %v719 = vpack.c.bf16 %v579, %v577
    %v720 = vpack.c.bf16 %v642, %v640
    %v721 = vpack.c.bf16 %v671, %v669
    %v722 = vpack.c.bf16 %v647, %v645
    %v723 = vpack.c.bf16 %v676, %v674
    %v724 = vpack.c.bf16 %v652, %v650
    %v725 = vpack.c.bf16 %v681, %v679
    %v726 = vpack.c.bf16 %v657, %v655
    %v727 = vpack.c.bf16 %v686, %v684
    %v728 = vld [vmem:[%s2] sm:$0xff]
    %v729 = vld [vmem:[%s2 + $0x8] sm:$0xf]
    %v730 = vld [vmem:[%s2 + $0xc] sm:$0xff]
    %v731 = vld [vmem:[%s2 + $0x14] sm:$0xf]
    %v732 = vld [vmem:[%s2 + $0x18] sm:$0xff]
    %v733 = vld [vmem:[%s2 + $0x20] sm:$0xf]
    %v734 = vld [vmem:[%s2 + $0x24] sm:$0xff]
    %v735 = vld [vmem:[%s2 + $0x2c] sm:$0xf]
    %v736 = vld [vmem:[%s3] sm:$0x3]
    %v738 = vperm.slane %v736, 0
    %v739 = vperm.slane %v736, 1
    %v750 = vunpack.c.l.b16 %v728
    %v751 = vunpack.c.h.b16 %v728
    %v752 = vunpack.c.l.b16 %v729
    %v753 = vunpack.c.l.b16 %v730
    %v754 = vunpack.c.h.b16 %v730
    %v755 = vunpack.c.l.b16 %v731
    %v756 = vunpack.c.l.b16 %v732
    %v757 = vunpack.c.h.b16 %v732
    %v758 = vunpack.c.l.b16 %v733
    %v759 = vunpack.c.l.b16 %v734
    %v760 = vunpack.c.h.b16 %v734
    %v761 = vunpack.c.l.b16 %v735
    %v762 = vpack.c.b16 %v753, %v750
    %v763 = vpack.c.b16 %v754, %v751
    %v764 = vpack.c.b16 %v755, %v752
    %v765 = vpack.c.b16 %v759, %v756
    %v766 = vpack.c.b16 %v760, %v757
    %v767 = vpack.c.b16 %v761, %v758
    %v773 = vsel %vm193, %v764, 0
    %v776 = vsel %vm193, %v767, 0
    %778 = vmatpush.bf16.msra.mxu0 %v702
    %779 = vmatpush.bf16.msra.mxu0 %v700
    %780 = vmatpush.bf16.msra.mxu0 %v698
    %781 = vmatpush.bf16.msra.mxu0 %v696
    %782 = vmatpush.bf16.msra.mxu0 %v694
    %783 = vmatpush.bf16.msra.mxu0 %v692
    %784 = vmatpush.bf16.msra.mxu0 %v690
    %785 = vmatpush.bf16.msra.mxu0 %v688
    %786 = vmatmul.bf16.gmra.mxu0 %v762
    %v787 = vpop.f32.mrf.mxu0
    %v788 = vadd.f32 %v738, %v787
    %v789 = vpop.f32.mrf.mxu0
    %v790 = vadd.f32 %v738, %v789
    %791 = vmatmul.bf16.gmra.mxu0 %v765
    %v792 = vpop.f32.mrf.mxu0
    %v793 = vadd.f32 %v738, %v792
    %v794 = vpop.f32.mrf.mxu0
    %v795 = vadd.f32 %v738, %v794
    %796 = vdwg.mxu0
    %797 = vmatpush.bf16.msra.mxu0 %v718
    %798 = vmatpush.bf16.msra.mxu0 %v716
    %799 = vmatpush.bf16.msra.mxu0 %v714
    %800 = vmatpush.bf16.msra.mxu0 %v712
    %801 = vmatpush.bf16.msra.mxu0 %v710
    %802 = vmatpush.bf16.msra.mxu0 %v708
    %803 = vmatpush.bf16.msra.mxu0 %v706
    %804 = vmatpush.bf16.msra.mxu0 %v704
    %805 = vmatmul.bf16.gmra.mxu0 %v763
    %v806 = vpop.f32.mrf.mxu0
    %v807 = vadd.f32 %v788, %v806
    %v808 = vpop.f32.mrf.mxu0
    %v809 = vadd.f32 %v790, %v808
    %810 = vmatmul.bf16.gmra.mxu0 %v766
    %v811 = vpop.f32.mrf.mxu0
    %v812 = vadd.f32 %v793, %v811
    %v813 = vpop.f32.mrf.mxu0
    %v814 = vadd.f32 %v795, %v813
    %815 = vdwg.mxu0
    %816 = vmatpush.bf16.msra.mxu0 0
    %817 = vmatpush.bf16.msra.mxu0 0
    %818 = vmatpush.bf16.msra.mxu0 0
    %819 = vmatpush.bf16.msra.mxu0 0
    %820 = vmatpush.bf16.msra.mxu0 %v726
    %821 = vmatpush.bf16.msra.mxu0 %v724
    %822 = vmatpush.bf16.msra.mxu0 %v722
    %823 = vmatpush.bf16.msra.mxu0 %v720
    %824 = vmatmul.bf16.gmra.mxu0 %v773
    %v825 = vpop.f32.mrf.mxu0
    %v826 = vadd.f32 %v807, %v825
    %v827 = vpop.f32.mrf.mxu0
    %v828 = vadd.f32 %v809, %v827
    %829 = vmatmul.bf16.gmra.mxu0 %v776
    %v830 = vpop.f32.mrf.mxu0
    %v831 = vadd.f32 %v812, %v830
    %v832 = vpop.f32.mrf.mxu0
    %v833 = vadd.f32 %v814, %v832
    %834 = vdwg.mxu0
    %835 = vmatpush.bf16.msra.mxu0 %v703
    %836 = vmatpush.bf16.msra.mxu0 %v701
    %837 = vmatpush.bf16.msra.mxu0 %v699
    %838 = vmatpush.bf16.msra.mxu0 %v697
    %839 = vmatpush.bf16.msra.mxu0 %v695
    %840 = vmatpush.bf16.msra.mxu0 %v693
    %841 = vmatpush.bf16.msra.mxu0 %v691
    %842 = vmatpush.bf16.msra.mxu0 %v689
    %843 = vmatmul.bf16.gmra.mxu0 %v762
    %v844 = vpop.f32.mrf.mxu0
    %v845 = vadd.f32 %v739, %v844
    %v846 = vpop.f32.mrf.mxu0
    %v847 = vadd.f32 %v739, %v846
    %848 = vmatmul.bf16.gmra.mxu0 %v765
    %v849 = vpop.f32.mrf.mxu0
    %v850 = vadd.f32 %v739, %v849
    %v851 = vpop.f32.mrf.mxu0
    %v852 = vadd.f32 %v739, %v851
    %853 = vdwg.mxu0
    %854 = vmatpush.bf16.msra.mxu0 %v719
    %855 = vmatpush.bf16.msra.mxu0 %v717
    %856 = vmatpush.bf16.msra.mxu0 %v715
    %857 = vmatpush.bf16.msra.mxu0 %v713
    %858 = vmatpush.bf16.msra.mxu0 %v711
    %859 = vmatpush.bf16.msra.mxu0 %v709
    %860 = vmatpush.bf16.msra.mxu0 %v707
    %861 = vmatpush.bf16.msra.mxu0 %v705
    %862 = vmatmul.bf16.gmra.mxu0 %v763
    %v863 = vpop.f32.mrf.mxu0
    %v864 = vadd.f32 %v845, %v863
    %v865 = vpop.f32.mrf.mxu0
    %v866 = vadd.f32 %v847, %v865
    %867 = vmatmul.bf16.gmra.mxu0 %v766
    %v868 = vpop.f32.mrf.mxu0
    %v869 = vadd.f32 %v850, %v868
    %v870 = vpop.f32.mrf.mxu0
    %v871 = vadd.f32 %v852, %v870
    %872 = vdwg.mxu0
    %873 = vmatpush.bf16.msra.mxu0 0
    %874 = vmatpush.bf16.msra.mxu0 0
    %875 = vmatpush.bf16.msra.mxu0 0
    %876 = vmatpush.bf16.msra.mxu0 0
    %877 = vmatpush.bf16.msra.mxu0 %v727
    %878 = vmatpush.bf16.msra.mxu0 %v725
    %879 = vmatpush.bf16.msra.mxu0 %v723
    %880 = vmatpush.bf16.msra.mxu0 %v721
    %881 = vmatmul.bf16.gmra.mxu0 %v773
    %v882 = vpop.f32.mrf.mxu0
    %v883 = vadd.f32 %v864, %v882
    %v884 = vpop.f32.mrf.mxu0
    %v885 = vadd.f32 %v866, %v884
    %886 = vmatmul.bf16.gmra.mxu0 %v776
    %v887 = vpop.f32.mrf.mxu0
    %v888 = vadd.f32 %v869, %v887
    %v889 = vpop.f32.mrf.mxu0
    %v890 = vadd.f32 %v871, %v889
    %891 = vdwg.mxu0
    %v892 = vmax.f32 %v826, 0.0
    %v893 = vmax.f32 %v883, 0.0
    %v894 = vmax.f32 %v828, 0.0
    %v895 = vmax.f32 %v885, 0.0
    %v896 = vmax.f32 %v831, 0.0
    %v897 = vmax.f32 %v888, 0.0
    %v898 = vmax.f32 %v833, 0.0
    %v899 = vmax.f32 %v890, 0.0
    %v900 = vpack.c.bf16 %v894, %v892
    %v901 = vpack.c.bf16 %v895, %v893
    %v902 = vpack.c.bf16 %v898, %v896
    %v903 = vpack.c.bf16 %v899, %v897
    %v904 = vld [vmem:[%s4] sm:$0xff]
    %v905 = vld [vmem:[%s4 + $0x8] sm:$0xff]
    %v906 = vld [vmem:[%s4 + $0x10] sm:$0xff]
    %v907 = vld [vmem:[%s4 + $0x18] sm:$0xff]
    %v908 = vld [vmem:[%s4 + $0x20] sm:$0xff]
    %v909 = vld [vmem:[%s4 + $0x28] sm:$0xff]
    %v910 = vld [vmem:[%s4 + $0x30] sm:$0xff]
    %v911 = vld [vmem:[%s4 + $0x38] sm:$0xff]
    %v912 = vld [vmem:[%s4 + $0x40] sm:$0xff]
    %v913 = vld [vmem:[%s4 + $0x48] sm:$0xff]
    %v914 = vld [vmem:[%s4 + $0x50] sm:$0xff]
    %v915 = vld [vmem:[%s4 + $0x58] sm:$0xff]
    %v916 = vld [vmem:[%s4 + $0x60] sm:$0xff]
    %v917 = vld [vmem:[%s4 + $0x68] sm:$0xff]
    %v918 = vld [vmem:[%s4 + $0x70] sm:$0xff]
    %v919 = vld [vmem:[%s4 + $0x78] sm:$0xff]
    %v920 = vld [vmem:[%s4 + $0x80] sm:$0xff]
    %v921 = vld [vmem:[%s4 + $0x88] sm:$0xff]
    %v922 = vld [vmem:[%s4 + $0x90] sm:$0xff]
    %v923 = vld [vmem:[%s4 + $0x98] sm:$0xff]
    %v924 = vld [vmem:[%s4 + $0xa0] sm:$0xff]
    %v925 = vld [vmem:[%s4 + $0xa8] sm:$0xff]
    %v926 = vld [vmem:[%s4 + $0xb0] sm:$0xff]
    %v927 = vld [vmem:[%s4 + $0xb8] sm:$0xff]
    %v928 = vld [vmem:[%s4 + $0xc0] sm:$0xff]
    %v929 = vld [vmem:[%s4 + $0xc8] sm:$0xff]
    %v930 = vld [vmem:[%s4 + $0xd0] sm:$0xff]
    %v931 = vld [vmem:[%s4 + $0xd8] sm:$0xff]
    %v960 = vunpack.c.l.b16 %v904
    %v961 = vunpack.c.h.b16 %v904
    %v962 = vunpack.c.l.b16 %v905
    %v963 = vunpack.c.h.b16 %v905
    %v964 = vunpack.c.l.b16 %v906
    %v965 = vunpack.c.h.b16 %v906
    %v966 = vunpack.c.l.b16 %v907
    %v967 = vunpack.c.h.b16 %v907
    %v968 = vunpack.c.l.b16 %v908
    %v969 = vunpack.c.h.b16 %v908
    %v970 = vunpack.c.l.b16 %v909
    %v971 = vunpack.c.h.b16 %v909
    %v972 = vunpack.c.l.b16 %v910
    %v973 = vunpack.c.h.b16 %v910
    %v974 = vunpack.c.l.b16 %v911
    %v975 = vunpack.c.h.b16 %v911
    %v976 = vunpack.c.l.b16 %v912
    %v977 = vunpack.c.h.b16 %v912
    %v978 = vunpack.c.l.b16 %v913
    %v979 = vunpack.c.h.b16 %v913
    %v980 = vunpack.c.l.b16 %v914
    %v981 = vunpack.c.h.b16 %v914
    %v982 = vunpack.c.l.b16 %v915
    %v983 = vunpack.c.h.b16 %v915
    %v984 = vunpack.c.l.b16 %v916
    %v985 = vunpack.c.h.b16 %v916
    %v986 = vunpack.c.l.b16 %v917
    %v987 = vunpack.c.h.b16 %v917
    %v988 = vunpack.c.l.b16 %v918
    %v989 = vunpack.c.h.b16 %v918
    %v990 = vunpack.c.l.b16 %v919
    %v991 = vunpack.c.h.b16 %v919
    %v992 = vunpack.c.l.b16 %v920
    %v993 = vunpack.c.h.b16 %v920
    %v994 = vunpack.c.l.b16 %v921
    %v995 = vunpack.c.h.b16 %v921
    %v996 = vunpack.c.l.b16 %v922
    %v997 = vunpack.c.h.b16 %v922
    %v998 = vunpack.c.l.b16 %v923
    %v999 = vunpack.c.h.b16 %v923
    %v1000 = vunpack.c.l.b16 %v924
    %v1001 = vunpack.c.h.b16 %v924
    %v1002 = vunpack.c.l.b16 %v925
    %v1003 = vunpack.c.h.b16 %v925
    %v1004 = vunpack.c.l.b16 %v926
    %v1005 = vunpack.c.h.b16 %v926
    %v1006 = vunpack.c.l.b16 %v927
    %v1007 = vunpack.c.h.b16 %v927
    %v1008 = vunpack.c.l.b16 %v928
    %v1009 = vunpack.c.h.b16 %v928
    %v1010 = vunpack.c.l.b16 %v929
    %v1011 = vunpack.c.h.b16 %v929
    %v1012 = vunpack.c.l.b16 %v930
    %v1013 = vunpack.c.h.b16 %v930
    %v1014 = vunpack.c.l.b16 %v931
    %v1015 = vunpack.c.h.b16 %v931
    %v1016 = vpack.c.b16 %v962, %v960
    %v1017 = vpack.c.b16 %v963, %v961
    %v1018 = vpack.c.b16 %v966, %v964
    %v1019 = vpack.c.b16 %v967, %v965
    %v1020 = vpack.c.b16 %v970, %v968
    %v1021 = vpack.c.b16 %v971, %v969
    %v1022 = vpack.c.b16 %v974, %v972
    %v1023 = vpack.c.b16 %v975, %v973
    %v1024 = vpack.c.b16 %v978, %v976
    %v1025 = vpack.c.b16 %v979, %v977
    %v1026 = vpack.c.b16 %v982, %v980
    %v1027 = vpack.c.b16 %v983, %v981
    %v1028 = vpack.c.b16 %v986, %v984
    %v1029 = vpack.c.b16 %v987, %v985
    %v1030 = vpack.c.b16 %v990, %v988
    %v1031 = vpack.c.b16 %v991, %v989
    %v1032 = vpack.c.b16 %v994, %v992
    %v1033 = vpack.c.b16 %v995, %v993
    %v1034 = vpack.c.b16 %v998, %v996
    %v1035 = vpack.c.b16 %v999, %v997
    %v1036 = vpack.c.b16 %v1002, %v1000
    %v1037 = vpack.c.b16 %v1003, %v1001
    %v1038 = vpack.c.b16 %v1006, %v1004
    %v1039 = vpack.c.b16 %v1007, %v1005
    %v1040 = vpack.c.b16 %v1010, %v1008
    %v1041 = vpack.c.b16 %v1011, %v1009
    %v1042 = vpack.c.b16 %v1014, %v1012
    %v1043 = vpack.c.b16 %v1015, %v1013
    %vm1072 = vcmask 785408
    %v1074 = vsel %vm1072, %v901, 0
    %v1077 = vsel %vm1072, %v903, 0
    %1079 = vmatpush.bf16.msra.mxu0 %v1030
    %1080 = vmatpush.bf16.msra.mxu0 %v1028
    %1081 = vmatpush.bf16.msra.mxu0 %v1026
    %1082 = vmatpush.bf16.msra.mxu0 %v1024
    %1083 = vmatpush.bf16.msra.mxu0 %v1022
    %1084 = vmatpush.bf16.msra.mxu0 %v1020
    %1085 = vmatpush.bf16.msra.mxu0 %v1018
    %1086 = vmatpush.bf16.msra.mxu0 %v1016
    %1087 = vmatmul.bf16.gmra.mxu0 %v900
    %v1088 = vpop.f32.mrf.mxu0
    %v1089 = vadd.f32 0.0, %v1088
    %v1090 = vpop.f32.mrf.mxu0
    %v1091 = vadd.f32 0.0, %v1090
    %1092 = vmatmul.bf16.gmra.mxu0 %v902
    %v1093 = vpop.f32.mrf.mxu0
    %v1094 = vadd.f32 0.0, %v1093
    %v1095 = vpop.f32.mrf.mxu0
    %v1096 = vadd.f32 0.0, %v1095
    %1097 = vdwg.mxu0
    %1098 = vmatpush.bf16.msra.mxu0 0
    %1099 = vmatpush.bf16.msra.mxu0 0
    %1100 = vmatpush.bf16.msra.mxu0 %v1042
    %1101 = vmatpush.bf16.msra.mxu0 %v1040
    %1102 = vmatpush.bf16.msra.mxu0 %v1038
    %1103 = vmatpush.bf16.msra.mxu0 %v1036
    %1104 = vmatpush.bf16.msra.mxu0 %v1034
    %1105 = vmatpush.bf16.msra.mxu0 %v1032
    %1106 = vmatmul.bf16.gmra.mxu0 %v1074
    %v1107 = vpop.f32.mrf.mxu0
    %v1108 = vadd.f32 %v1089, %v1107
    %v1109 = vpop.f32.mrf.mxu0
    %v1110 = vadd.f32 %v1091, %v1109
    %1111 = vmatmul.bf16.gmra.mxu0 %v1077
    %v1112 = vpop.f32.mrf.mxu0
    %v1113 = vadd.f32 %v1094, %v1112
    %v1114 = vpop.f32.mrf.mxu0
    %v1115 = vadd.f32 %v1096, %v1114
    %1116 = vdwg.mxu0
    %1117 = vmatpush.bf16.msra.mxu0 %v1031
    %1118 = vmatpush.bf16.msra.mxu0 %v1029
    %1119 = vmatpush.bf16.msra.mxu0 %v1027
    %1120 = vmatpush.bf16.msra.mxu0 %v1025
    %1121 = vmatpush.bf16.msra.mxu0 %v1023
    %1122 = vmatpush.bf16.msra.mxu0 %v1021
    %1123 = vmatpush.bf16.msra.mxu0 %v1019
    %1124 = vmatpush.bf16.msra.mxu0 %v1017
    %1125 = vmatmul.bf16.gmra.mxu0 %v900
    %v1126 = vpop.f32.mrf.mxu0
    %v1127 = vadd.f32 0.0, %v1126
    %v1128 = vpop.f32.mrf.mxu0
    %v1129 = vadd.f32 0.0, %v1128
    %1130 = vmatmul.bf16.gmra.mxu0 %v902
    %v1131 = vpop.f32.mrf.mxu0
    %v1132 = vadd.f32 0.0, %v1131
    %v1133 = vpop.f32.mrf.mxu0
    %v1134 = vadd.f32 0.0, %v1133
    %1135 = vdwg.mxu0
    %1136 = vmatpush.bf16.msra.mxu0 0
    %1137 = vmatpush.bf16.msra.mxu0 0
    %1138 = vmatpush.bf16.msra.mxu0 %v1043
    %1139 = vmatpush.bf16.msra.mxu0 %v1041
    %1140 = vmatpush.bf16.msra.mxu0 %v1039
    %1141 = vmatpush.bf16.msra.mxu0 %v1037
    %1142 = vmatpush.bf16.msra.mxu0 %v1035
    %1143 = vmatpush.bf16.msra.mxu0 %v1033
    %1144 = vmatmul.bf16.gmra.mxu0 %v1074
    %v1145 = vpop.f32.mrf.mxu0
    %v1146 = vadd.f32 %v1127, %v1145
    %v1147 = vpop.f32.mrf.mxu0
    %v1148 = vadd.f32 %v1129, %v1147
    %1149 = vmatmul.bf16.gmra.mxu0 %v1077
    %v1150 = vpop.f32.mrf.mxu0
    %v1151 = vadd.f32 %v1132, %v1150
    %v1152 = vpop.f32.mrf.mxu0
    %v1153 = vadd.f32 %v1134, %v1152
    %1154 = vdwg.mxu0
    %s1155 = scalar_lea.vmem %s4, 224
    %v1156 = vld [vmem:[%s1155] sm:$0xff]
    %v1157 = vld [vmem:[%s1155 + $0x8] sm:$0xff]
    %v1158 = vld [vmem:[%s1155 + $0x10] sm:$0xff]
    %v1159 = vld [vmem:[%s1155 + $0x18] sm:$0xff]
    %v1160 = vld [vmem:[%s1155 + $0x20] sm:$0xff]
    %v1161 = vld [vmem:[%s1155 + $0x28] sm:$0xff]
    %v1162 = vld [vmem:[%s1155 + $0x30] sm:$0xff]
    %v1163 = vld [vmem:[%s1155 + $0x38] sm:$0xff]
    %v1164 = vld [vmem:[%s1155 + $0x40] sm:$0xff]
    %v1165 = vld [vmem:[%s1155 + $0x48] sm:$0xff]
    %v1166 = vld [vmem:[%s1155 + $0x50] sm:$0xff]
    %v1167 = vld [vmem:[%s1155 + $0x58] sm:$0xff]
    %v1168 = vld [vmem:[%s1155 + $0x60] sm:$0xff]
    %v1169 = vld [vmem:[%s1155 + $0x68] sm:$0xff]
    %v1170 = vld [vmem:[%s1155 + $0x70] sm:$0xff]
    %v1171 = vld [vmem:[%s1155 + $0x78] sm:$0xff]
    %v1172 = vld [vmem:[%s1155 + $0x80] sm:$0xff]
    %v1173 = vld [vmem:[%s1155 + $0x88] sm:$0xff]
    %v1174 = vld [vmem:[%s1155 + $0x90] sm:$0xff]
    %v1175 = vld [vmem:[%s1155 + $0x98] sm:$0xff]
    %v1176 = vld [vmem:[%s1155 + $0xa0] sm:$0xff]
    %v1177 = vld [vmem:[%s1155 + $0xa8] sm:$0xff]
    %v1178 = vld [vmem:[%s1155 + $0xb0] sm:$0xff]
    %v1179 = vld [vmem:[%s1155 + $0xb8] sm:$0xff]
    %v1180 = vld [vmem:[%s1155 + $0xc0] sm:$0xff]
    %v1181 = vld [vmem:[%s1155 + $0xc8] sm:$0xff]
    %v1182 = vld [vmem:[%s1155 + $0xd0] sm:$0xff]
    %v1183 = vld [vmem:[%s1155 + $0xd8] sm:$0xff]
    %v1212 = vunpack.c.l.b16 %v1156
    %v1213 = vunpack.c.h.b16 %v1156
    %v1214 = vunpack.c.l.b16 %v1157
    %v1215 = vunpack.c.h.b16 %v1157
    %v1216 = vunpack.c.l.b16 %v1158
    %v1217 = vunpack.c.h.b16 %v1158
    %v1218 = vunpack.c.l.b16 %v1159
    %v1219 = vunpack.c.h.b16 %v1159
    %v1220 = vunpack.c.l.b16 %v1160
    %v1221 = vunpack.c.h.b16 %v1160
    %v1222 = vunpack.c.l.b16 %v1161
    %v1223 = vunpack.c.h.b16 %v1161
    %v1224 = vunpack.c.l.b16 %v1162
    %v1225 = vunpack.c.h.b16 %v1162
    %v1226 = vunpack.c.l.b16 %v1163
    %v1227 = vunpack.c.h.b16 %v1163
    %v1228 = vunpack.c.l.b16 %v1164
    %v1229 = vunpack.c.h.b16 %v1164
    %v1230 = vunpack.c.l.b16 %v1165
    %v1231 = vunpack.c.h.b16 %v1165
    %v1232 = vunpack.c.l.b16 %v1166
    %v1233 = vunpack.c.h.b16 %v1166
    %v1234 = vunpack.c.l.b16 %v1167
    %v1235 = vunpack.c.h.b16 %v1167
    %v1236 = vunpack.c.l.b16 %v1168
    %v1237 = vunpack.c.h.b16 %v1168
    %v1238 = vunpack.c.l.b16 %v1169
    %v1239 = vunpack.c.h.b16 %v1169
    %v1240 = vunpack.c.l.b16 %v1170
    %v1241 = vunpack.c.h.b16 %v1170
    %v1242 = vunpack.c.l.b16 %v1171
    %v1243 = vunpack.c.h.b16 %v1171
    %v1244 = vunpack.c.l.b16 %v1172
    %v1245 = vunpack.c.h.b16 %v1172
    %v1246 = vunpack.c.l.b16 %v1173
    %v1247 = vunpack.c.h.b16 %v1173
    %v1248 = vunpack.c.l.b16 %v1174
    %v1249 = vunpack.c.h.b16 %v1174
    %v1250 = vunpack.c.l.b16 %v1175
    %v1251 = vunpack.c.h.b16 %v1175
    %v1252 = vunpack.c.l.b16 %v1176
    %v1253 = vunpack.c.h.b16 %v1176
    %v1254 = vunpack.c.l.b16 %v1177
    %v1255 = vunpack.c.h.b16 %v1177
    %v1256 = vunpack.c.l.b16 %v1178
    %v1257 = vunpack.c.h.b16 %v1178
    %v1258 = vunpack.c.l.b16 %v1179
    %v1259 = vunpack.c.h.b16 %v1179
    %v1260 = vunpack.c.l.b16 %v1180
    %v1261 = vunpack.c.h.b16 %v1180
    %v1262 = vunpack.c.l.b16 %v1181
    %v1263 = vunpack.c.h.b16 %v1181
    %v1264 = vunpack.c.l.b16 %v1182
    %v1265 = vunpack.c.h.b16 %v1182
    %v1266 = vunpack.c.l.b16 %v1183
    %v1267 = vunpack.c.h.b16 %v1183
    %v1268 = vpack.c.b16 %v1214, %v1212
    %v1269 = vpack.c.b16 %v1215, %v1213
    %v1270 = vpack.c.b16 %v1218, %v1216
    %v1271 = vpack.c.b16 %v1219, %v1217
    %v1272 = vpack.c.b16 %v1222, %v1220
    %v1273 = vpack.c.b16 %v1223, %v1221
    %v1274 = vpack.c.b16 %v1226, %v1224
    %v1275 = vpack.c.b16 %v1227, %v1225
    %v1276 = vpack.c.b16 %v1230, %v1228
    %v1277 = vpack.c.b16 %v1231, %v1229
    %v1278 = vpack.c.b16 %v1234, %v1232
    %v1279 = vpack.c.b16 %v1235, %v1233
    %v1280 = vpack.c.b16 %v1238, %v1236
    %v1281 = vpack.c.b16 %v1239, %v1237
    %v1282 = vpack.c.b16 %v1242, %v1240
    %v1283 = vpack.c.b16 %v1243, %v1241
    %v1284 = vpack.c.b16 %v1246, %v1244
    %v1285 = vpack.c.b16 %v1247, %v1245
    %v1286 = vpack.c.b16 %v1250, %v1248
    %v1287 = vpack.c.b16 %v1251, %v1249
    %v1288 = vpack.c.b16 %v1254, %v1252
    %v1289 = vpack.c.b16 %v1255, %v1253
    %v1290 = vpack.c.b16 %v1258, %v1256
    %v1291 = vpack.c.b16 %v1259, %v1257
    %v1292 = vpack.c.b16 %v1262, %v1260
    %v1293 = vpack.c.b16 %v1263, %v1261
    %v1294 = vpack.c.b16 %v1266, %v1264
    %v1295 = vpack.c.b16 %v1267, %v1265
    %1324 = vmatpush.bf16.msra.mxu0 %v1282
    %1325 = vmatpush.bf16.msra.mxu0 %v1280
    %1326 = vmatpush.bf16.msra.mxu0 %v1278
    %1327 = vmatpush.bf16.msra.mxu0 %v1276
    %1328 = vmatpush.bf16.msra.mxu0 %v1274
    %1329 = vmatpush.bf16.msra.mxu0 %v1272
    %1330 = vmatpush.bf16.msra.mxu0 %v1270
    %1331 = vmatpush.bf16.msra.mxu0 %v1268
    %1332 = vmatmul.bf16.gmra.mxu0 %v900
    %v1333 = vpop.f32.mrf.mxu0
    %v1334 = vadd.f32 0.0, %v1333
    %v1335 = vpop.f32.mrf.mxu0
    %v1336 = vadd.f32 0.0, %v1335
    %1337 = vmatmul.bf16.gmra.mxu0 %v902
    %v1338 = vpop.f32.mrf.mxu0
    %v1339 = vadd.f32 0.0, %v1338
    %v1340 = vpop.f32.mrf.mxu0
    %v1341 = vadd.f32 0.0, %v1340
    %1342 = vdwg.mxu0
    %1343 = vmatpush.bf16.msra.mxu0 0
    %1344 = vmatpush.bf16.msra.mxu0 0
    %1345 = vmatpush.bf16.msra.mxu0 %v1294
    %1346 = vmatpush.bf16.msra.mxu0 %v1292
    %1347 = vmatpush.bf16.msra.mxu0 %v1290
    %1348 = vmatpush.bf16.msra.mxu0 %v1288
    %1349 = vmatpush.bf16.msra.mxu0 %v1286
    %1350 = vmatpush.bf16.msra.mxu0 %v1284
    %1351 = vmatmul.bf16.gmra.mxu0 %v1074
    %v1352 = vpop.f32.mrf.mxu0
    %v1353 = vadd.f32 %v1334, %v1352
    %v1354 = vpop.f32.mrf.mxu0
    %v1355 = vadd.f32 %v1336, %v1354
    %1356 = vmatmul.bf16.gmra.mxu0 %v1077
    %v1357 = vpop.f32.mrf.mxu0
    %v1358 = vadd.f32 %v1339, %v1357
    %v1359 = vpop.f32.mrf.mxu0
    %v1360 = vadd.f32 %v1341, %v1359
    %1361 = vdwg.mxu0
    %1362 = vmatpush.bf16.msra.mxu0 %v1283
    %1363 = vmatpush.bf16.msra.mxu0 %v1281
    %1364 = vmatpush.bf16.msra.mxu0 %v1279
    %1365 = vmatpush.bf16.msra.mxu0 %v1277
    %1366 = vmatpush.bf16.msra.mxu0 %v1275
    %1367 = vmatpush.bf16.msra.mxu0 %v1273
    %1368 = vmatpush.bf16.msra.mxu0 %v1271
    %1369 = vmatpush.bf16.msra.mxu0 %v1269
    %1370 = vmatmul.bf16.gmra.mxu0 %v900
    %v1371 = vpop.f32.mrf.mxu0
    %v1372 = vadd.f32 0.0, %v1371
    %v1373 = vpop.f32.mrf.mxu0
    %v1374 = vadd.f32 0.0, %v1373
    %1375 = vmatmul.bf16.gmra.mxu0 %v902
    %v1376 = vpop.f32.mrf.mxu0
    %v1377 = vadd.f32 0.0, %v1376
    %v1378 = vpop.f32.mrf.mxu0
    %v1379 = vadd.f32 0.0, %v1378
    %1380 = vdwg.mxu0
    %1381 = vmatpush.bf16.msra.mxu0 0
    %1382 = vmatpush.bf16.msra.mxu0 0
    %1383 = vmatpush.bf16.msra.mxu0 %v1295
    %1384 = vmatpush.bf16.msra.mxu0 %v1293
    %1385 = vmatpush.bf16.msra.mxu0 %v1291
    %1386 = vmatpush.bf16.msra.mxu0 %v1289
    %1387 = vmatpush.bf16.msra.mxu0 %v1287
    %1388 = vmatpush.bf16.msra.mxu0 %v1285
    %1389 = vmatmul.bf16.gmra.mxu0 %v1074
    %v1390 = vpop.f32.mrf.mxu0
    %v1391 = vadd.f32 %v1372, %v1390
    %v1392 = vpop.f32.mrf.mxu0
    %v1393 = vadd.f32 %v1374, %v1392
    %1394 = vmatmul.bf16.gmra.mxu0 %v1077
    %v1395 = vpop.f32.mrf.mxu0
    %v1396 = vadd.f32 %v1377, %v1395
    %v1397 = vpop.f32.mrf.mxu0
    %v1398 = vadd.f32 %v1379, %v1397
    %1399 = vdwg.mxu0
    %s1400 = scalar_lea.vmem %s4, 448
    %v1401 = vld [vmem:[%s1400] sm:$0xff]
    %v1402 = vld [vmem:[%s1400 + $0x8] sm:$0xff]
    %v1403 = vld [vmem:[%s1400 + $0x10] sm:$0xff]
    %v1404 = vld [vmem:[%s1400 + $0x18] sm:$0xff]
    %v1405 = vld [vmem:[%s1400 + $0x20] sm:$0xff]
    %v1406 = vld [vmem:[%s1400 + $0x28] sm:$0xff]
    %v1407 = vld [vmem:[%s1400 + $0x30] sm:$0xff]
    %v1408 = vld [vmem:[%s1400 + $0x38] sm:$0xff]
    %v1409 = vld [vmem:[%s1400 + $0x40] sm:$0xff]
    %v1410 = vld [vmem:[%s1400 + $0x48] sm:$0xff]
    %v1411 = vld [vmem:[%s1400 + $0x50] sm:$0xff]
    %v1412 = vld [vmem:[%s1400 + $0x58] sm:$0xff]
    %v1413 = vld [vmem:[%s1400 + $0x60] sm:$0xff]
    %v1414 = vld [vmem:[%s1400 + $0x68] sm:$0xff]
    %v1415 = vld [vmem:[%s1400 + $0x70] sm:$0xff]
    %v1416 = vld [vmem:[%s1400 + $0x78] sm:$0xff]
    %v1417 = vld [vmem:[%s1400 + $0x80] sm:$0xff]
    %v1418 = vld [vmem:[%s1400 + $0x88] sm:$0xff]
    %v1419 = vld [vmem:[%s1400 + $0x90] sm:$0xff]
    %v1420 = vld [vmem:[%s1400 + $0x98] sm:$0xff]
    %v1421 = vld [vmem:[%s1400 + $0xa0] sm:$0xff]
    %v1422 = vld [vmem:[%s1400 + $0xa8] sm:$0xff]
    %v1423 = vld [vmem:[%s1400 + $0xb0] sm:$0xff]
    %v1424 = vld [vmem:[%s1400 + $0xb8] sm:$0xff]
    %v1425 = vld [vmem:[%s1400 + $0xc0] sm:$0xff]
    %v1426 = vld [vmem:[%s1400 + $0xc8] sm:$0xff]
    %v1427 = vld [vmem:[%s1400 + $0xd0] sm:$0xff]
    %v1428 = vld [vmem:[%s1400 + $0xd8] sm:$0xff]
    %v1457 = vunpack.c.l.b16 %v1401
    %v1458 = vunpack.c.h.b16 %v1401
    %v1459 = vunpack.c.l.b16 %v1402
    %v1460 = vunpack.c.h.b16 %v1402
    %v1461 = vunpack.c.l.b16 %v1403
    %v1462 = vunpack.c.h.b16 %v1403
    %v1463 = vunpack.c.l.b16 %v1404
    %v1464 = vunpack.c.h.b16 %v1404
    %v1465 = vunpack.c.l.b16 %v1405
    %v1466 = vunpack.c.h.b16 %v1405
    %v1467 = vunpack.c.l.b16 %v1406
    %v1468 = vunpack.c.h.b16 %v1406
    %v1469 = vunpack.c.l.b16 %v1407
    %v1470 = vunpack.c.h.b16 %v1407
    %v1471 = vunpack.c.l.b16 %v1408
    %v1472 = vunpack.c.h.b16 %v1408
    %v1473 = vunpack.c.l.b16 %v1409
    %v1474 = vunpack.c.h.b16 %v1409
    %v1475 = vunpack.c.l.b16 %v1410
    %v1476 = vunpack.c.h.b16 %v1410
    %v1477 = vunpack.c.l.b16 %v1411
    %v1478 = vunpack.c.h.b16 %v1411
    %v1479 = vunpack.c.l.b16 %v1412
    %v1480 = vunpack.c.h.b16 %v1412
    %v1481 = vunpack.c.l.b16 %v1413
    %v1482 = vunpack.c.h.b16 %v1413
    %v1483 = vunpack.c.l.b16 %v1414
    %v1484 = vunpack.c.h.b16 %v1414
    %v1485 = vunpack.c.l.b16 %v1415
    %v1486 = vunpack.c.h.b16 %v1415
    %v1487 = vunpack.c.l.b16 %v1416
    %v1488 = vunpack.c.h.b16 %v1416
    %v1489 = vunpack.c.l.b16 %v1417
    %v1490 = vunpack.c.h.b16 %v1417
    %v1491 = vunpack.c.l.b16 %v1418
    %v1492 = vunpack.c.h.b16 %v1418
    %v1493 = vunpack.c.l.b16 %v1419
    %v1494 = vunpack.c.h.b16 %v1419
    %v1495 = vunpack.c.l.b16 %v1420
    %v1496 = vunpack.c.h.b16 %v1420
    %v1497 = vunpack.c.l.b16 %v1421
    %v1498 = vunpack.c.h.b16 %v1421
    %v1499 = vunpack.c.l.b16 %v1422
    %v1500 = vunpack.c.h.b16 %v1422
    %v1501 = vunpack.c.l.b16 %v1423
    %v1502 = vunpack.c.h.b16 %v1423
    %v1503 = vunpack.c.l.b16 %v1424
    %v1504 = vunpack.c.h.b16 %v1424
    %v1505 = vunpack.c.l.b16 %v1425
    %v1506 = vunpack.c.h.b16 %v1425
    %v1507 = vunpack.c.l.b16 %v1426
    %v1508 = vunpack.c.h.b16 %v1426
    %v1509 = vunpack.c.l.b16 %v1427
    %v1510 = vunpack.c.h.b16 %v1427
    %v1511 = vunpack.c.l.b16 %v1428
    %v1512 = vunpack.c.h.b16 %v1428
    %v1513 = vpack.c.b16 %v1459, %v1457
    %v1514 = vpack.c.b16 %v1460, %v1458
    %v1515 = vpack.c.b16 %v1463, %v1461
    %v1516 = vpack.c.b16 %v1464, %v1462
    %v1517 = vpack.c.b16 %v1467, %v1465
    %v1518 = vpack.c.b16 %v1468, %v1466
    %v1519 = vpack.c.b16 %v1471, %v1469
    %v1520 = vpack.c.b16 %v1472, %v1470
    %v1521 = vpack.c.b16 %v1475, %v1473
    %v1522 = vpack.c.b16 %v1476, %v1474
    %v1523 = vpack.c.b16 %v1479, %v1477
    %v1524 = vpack.c.b16 %v1480, %v1478
    %v1525 = vpack.c.b16 %v1483, %v1481
    %v1526 = vpack.c.b16 %v1484, %v1482
    %v1527 = vpack.c.b16 %v1487, %v1485
    %v1528 = vpack.c.b16 %v1488, %v1486
    %v1529 = vpack.c.b16 %v1491, %v1489
    %v1530 = vpack.c.b16 %v1492, %v1490
    %v1531 = vpack.c.b16 %v1495, %v1493
    %v1532 = vpack.c.b16 %v1496, %v1494
    %v1533 = vpack.c.b16 %v1499, %v1497
    %v1534 = vpack.c.b16 %v1500, %v1498
    %v1535 = vpack.c.b16 %v1503, %v1501
    %v1536 = vpack.c.b16 %v1504, %v1502
    %v1537 = vpack.c.b16 %v1507, %v1505
    %v1538 = vpack.c.b16 %v1508, %v1506
    %v1539 = vpack.c.b16 %v1511, %v1509
    %v1540 = vpack.c.b16 %v1512, %v1510
    %1569 = vmatpush.bf16.msra.mxu0 %v1527
    %1570 = vmatpush.bf16.msra.mxu0 %v1525
    %1571 = vmatpush.bf16.msra.mxu0 %v1523
    %1572 = vmatpush.bf16.msra.mxu0 %v1521
    %1573 = vmatpush.bf16.msra.mxu0 %v1519
    %1574 = vmatpush.bf16.msra.mxu0 %v1517
    %1575 = vmatpush.bf16.msra.mxu0 %v1515
    %1576 = vmatpush.bf16.msra.mxu0 %v1513
    %1577 = vmatmul.bf16.gmra.mxu0 %v900
    %v1578 = vpop.f32.mrf.mxu0
    %v1579 = vadd.f32 0.0, %v1578
    %v1580 = vpop.f32.mrf.mxu0
    %v1581 = vadd.f32 0.0, %v1580
    %1582 = vmatmul.bf16.gmra.mxu0 %v902
    %v1583 = vpop.f32.mrf.mxu0
    %v1584 = vadd.f32 0.0, %v1583
    %v1585 = vpop.f32.mrf.mxu0
    %v1586 = vadd.f32 0.0, %v1585
    %1587 = vdwg.mxu0
    %1588 = vmatpush.bf16.msra.mxu0 0
    %1589 = vmatpush.bf16.msra.mxu0 0
    %1590 = vmatpush.bf16.msra.mxu0 %v1539
    %1591 = vmatpush.bf16.msra.mxu0 %v1537
    %1592 = vmatpush.bf16.msra.mxu0 %v1535
    %1593 = vmatpush.bf16.msra.mxu0 %v1533
    %1594 = vmatpush.bf16.msra.mxu0 %v1531
    %1595 = vmatpush.bf16.msra.mxu0 %v1529
    %1596 = vmatmul.bf16.gmra.mxu0 %v1074
    %v1597 = vpop.f32.mrf.mxu0
    %v1598 = vadd.f32 %v1579, %v1597
    %v1599 = vpop.f32.mrf.mxu0
    %v1600 = vadd.f32 %v1581, %v1599
    %1601 = vmatmul.bf16.gmra.mxu0 %v1077
    %v1602 = vpop.f32.mrf.mxu0
    %v1603 = vadd.f32 %v1584, %v1602
    %v1604 = vpop.f32.mrf.mxu0
    %v1605 = vadd.f32 %v1586, %v1604
    %1606 = vdwg.mxu0
    %1607 = vmatpush.bf16.msra.mxu0 %v1528
    %1608 = vmatpush.bf16.msra.mxu0 %v1526
    %1609 = vmatpush.bf16.msra.mxu0 %v1524
    %1610 = vmatpush.bf16.msra.mxu0 %v1522
    %1611 = vmatpush.bf16.msra.mxu0 %v1520
    %1612 = vmatpush.bf16.msra.mxu0 %v1518
    %1613 = vmatpush.bf16.msra.mxu0 %v1516
    %1614 = vmatpush.bf16.msra.mxu0 %v1514
    %1615 = vmatmul.bf16.gmra.mxu0 %v900
    %v1616 = vpop.f32.mrf.mxu0
    %v1617 = vadd.f32 0.0, %v1616
    %v1618 = vpop.f32.mrf.mxu0
    %v1619 = vadd.f32 0.0, %v1618
    %1620 = vmatmul.bf16.gmra.mxu0 %v902
    %v1621 = vpop.f32.mrf.mxu0
    %v1622 = vadd.f32 0.0, %v1621
    %v1623 = vpop.f32.mrf.mxu0
    %v1624 = vadd.f32 0.0, %v1623
    %1625 = vdwg.mxu0
    %1626 = vmatpush.bf16.msra.mxu0 0
    %1627 = vmatpush.bf16.msra.mxu0 0
    %1628 = vmatpush.bf16.msra.mxu0 %v1540
    %1629 = vmatpush.bf16.msra.mxu0 %v1538
    %1630 = vmatpush.bf16.msra.mxu0 %v1536
    %1631 = vmatpush.bf16.msra.mxu0 %v1534
    %1632 = vmatpush.bf16.msra.mxu0 %v1532
    %1633 = vmatpush.bf16.msra.mxu0 %v1530
    %1634 = vmatmul.bf16.gmra.mxu0 %v1074
    %v1635 = vpop.f32.mrf.mxu0
    %v1636 = vadd.f32 %v1617, %v1635
    %v1637 = vpop.f32.mrf.mxu0
    %v1638 = vadd.f32 %v1619, %v1637
    %1639 = vmatmul.bf16.gmra.mxu0 %v1077
    %v1640 = vpop.f32.mrf.mxu0
    %v1641 = vadd.f32 %v1622, %v1640
    %v1642 = vpop.f32.mrf.mxu0
    %v1643 = vadd.f32 %v1624, %v1642
    %1644 = vdwg.mxu0
    %s1645 = scalar_lea.vmem %s4, 672
    %v1646 = vld [vmem:[%s1645] sm:$0xff]
    %v1647 = vld [vmem:[%s1645 + $0x8] sm:$0xff]
    %v1648 = vld [vmem:[%s1645 + $0x10] sm:$0xff]
    %v1649 = vld [vmem:[%s1645 + $0x18] sm:$0xff]
    %v1650 = vld [vmem:[%s1645 + $0x20] sm:$0xff]
    %v1651 = vld [vmem:[%s1645 + $0x28] sm:$0xff]
    %v1652 = vld [vmem:[%s1645 + $0x30] sm:$0xff]
    %v1653 = vld [vmem:[%s1645 + $0x38] sm:$0xff]
    %v1654 = vld [vmem:[%s1645 + $0x40] sm:$0xff]
    %v1655 = vld [vmem:[%s1645 + $0x48] sm:$0xff]
    %v1656 = vld [vmem:[%s1645 + $0x50] sm:$0xff]
    %v1657 = vld [vmem:[%s1645 + $0x58] sm:$0xff]
    %v1658 = vld [vmem:[%s1645 + $0x60] sm:$0xff]
    %v1659 = vld [vmem:[%s1645 + $0x68] sm:$0xff]
    %v1660 = vld [vmem:[%s1645 + $0x70] sm:$0xff]
    %v1661 = vld [vmem:[%s1645 + $0x78] sm:$0xff]
    %v1662 = vld [vmem:[%s1645 + $0x80] sm:$0xff]
    %v1663 = vld [vmem:[%s1645 + $0x88] sm:$0xff]
    %v1664 = vld [vmem:[%s1645 + $0x90] sm:$0xff]
    %v1665 = vld [vmem:[%s1645 + $0x98] sm:$0xff]
    %v1666 = vld [vmem:[%s1645 + $0xa0] sm:$0xff]
    %v1667 = vld [vmem:[%s1645 + $0xa8] sm:$0xff]
    %v1668 = vld [vmem:[%s1645 + $0xb0] sm:$0xff]
    %v1669 = vld [vmem:[%s1645 + $0xb8] sm:$0xff]
    %v1670 = vld [vmem:[%s1645 + $0xc0] sm:$0xff]
    %v1671 = vld [vmem:[%s1645 + $0xc8] sm:$0xff]
    %v1672 = vld [vmem:[%s1645 + $0xd0] sm:$0xff]
    %v1673 = vld [vmem:[%s1645 + $0xd8] sm:$0xff]
    %v1702 = vunpack.c.l.b16 %v1646
    %v1703 = vunpack.c.h.b16 %v1646
    %v1704 = vunpack.c.l.b16 %v1647
    %v1705 = vunpack.c.h.b16 %v1647
    %v1706 = vunpack.c.l.b16 %v1648
    %v1707 = vunpack.c.h.b16 %v1648
    %v1708 = vunpack.c.l.b16 %v1649
    %v1709 = vunpack.c.h.b16 %v1649
    %v1710 = vunpack.c.l.b16 %v1650
    %v1711 = vunpack.c.h.b16 %v1650
    %v1712 = vunpack.c.l.b16 %v1651
    %v1713 = vunpack.c.h.b16 %v1651
    %v1714 = vunpack.c.l.b16 %v1652
    %v1715 = vunpack.c.h.b16 %v1652
    %v1716 = vunpack.c.l.b16 %v1653
    %v1717 = vunpack.c.h.b16 %v1653
    %v1718 = vunpack.c.l.b16 %v1654
    %v1719 = vunpack.c.h.b16 %v1654
    %v1720 = vunpack.c.l.b16 %v1655
    %v1721 = vunpack.c.h.b16 %v1655
    %v1722 = vunpack.c.l.b16 %v1656
    %v1723 = vunpack.c.h.b16 %v1656
    %v1724 = vunpack.c.l.b16 %v1657
    %v1725 = vunpack.c.h.b16 %v1657
    %v1726 = vunpack.c.l.b16 %v1658
    %v1727 = vunpack.c.h.b16 %v1658
    %v1728 = vunpack.c.l.b16 %v1659
    %v1729 = vunpack.c.h.b16 %v1659
    %v1730 = vunpack.c.l.b16 %v1660
    %v1731 = vunpack.c.h.b16 %v1660
    %v1732 = vunpack.c.l.b16 %v1661
    %v1733 = vunpack.c.h.b16 %v1661
    %v1734 = vunpack.c.l.b16 %v1662
    %v1735 = vunpack.c.h.b16 %v1662
    %v1736 = vunpack.c.l.b16 %v1663
    %v1737 = vunpack.c.h.b16 %v1663
    %v1738 = vunpack.c.l.b16 %v1664
    %v1739 = vunpack.c.h.b16 %v1664
    %v1740 = vunpack.c.l.b16 %v1665
    %v1741 = vunpack.c.h.b16 %v1665
    %v1742 = vunpack.c.l.b16 %v1666
    %v1743 = vunpack.c.h.b16 %v1666
    %v1744 = vunpack.c.l.b16 %v1667
    %v1745 = vunpack.c.h.b16 %v1667
    %v1746 = vunpack.c.l.b16 %v1668
    %v1747 = vunpack.c.h.b16 %v1668
    %v1748 = vunpack.c.l.b16 %v1669
    %v1749 = vunpack.c.h.b16 %v1669
    %v1750 = vunpack.c.l.b16 %v1670
    %v1751 = vunpack.c.h.b16 %v1670
    %v1752 = vunpack.c.l.b16 %v1671
    %v1753 = vunpack.c.h.b16 %v1671
    %v1754 = vunpack.c.l.b16 %v1672
    %v1755 = vunpack.c.h.b16 %v1672
    %v1756 = vunpack.c.l.b16 %v1673
    %v1757 = vunpack.c.h.b16 %v1673
    %v1758 = vpack.c.b16 %v1704, %v1702
    %v1759 = vpack.c.b16 %v1705, %v1703
    %v1760 = vpack.c.b16 %v1708, %v1706
    %v1761 = vpack.c.b16 %v1709, %v1707
    %v1762 = vpack.c.b16 %v1712, %v1710
    %v1763 = vpack.c.b16 %v1713, %v1711
    %v1764 = vpack.c.b16 %v1716, %v1714
    %v1765 = vpack.c.b16 %v1717, %v1715
    %v1766 = vpack.c.b16 %v1720, %v1718
    %v1767 = vpack.c.b16 %v1721, %v1719
    %v1768 = vpack.c.b16 %v1724, %v1722
    %v1769 = vpack.c.b16 %v1725, %v1723
    %v1770 = vpack.c.b16 %v1728, %v1726
    %v1771 = vpack.c.b16 %v1729, %v1727
    %v1772 = vpack.c.b16 %v1732, %v1730
    %v1773 = vpack.c.b16 %v1733, %v1731
    %v1774 = vpack.c.b16 %v1736, %v1734
    %v1775 = vpack.c.b16 %v1737, %v1735
    %v1776 = vpack.c.b16 %v1740, %v1738
    %v1777 = vpack.c.b16 %v1741, %v1739
    %v1778 = vpack.c.b16 %v1744, %v1742
    %v1779 = vpack.c.b16 %v1745, %v1743
    %v1780 = vpack.c.b16 %v1748, %v1746
    %v1781 = vpack.c.b16 %v1749, %v1747
    %v1782 = vpack.c.b16 %v1752, %v1750
    %v1783 = vpack.c.b16 %v1753, %v1751
    %v1784 = vpack.c.b16 %v1756, %v1754
    %v1785 = vpack.c.b16 %v1757, %v1755
    %1814 = vmatpush.bf16.msra.mxu0 %v1772
    %1815 = vmatpush.bf16.msra.mxu0 %v1770
    %1816 = vmatpush.bf16.msra.mxu0 %v1768
    %1817 = vmatpush.bf16.msra.mxu0 %v1766
    %1818 = vmatpush.bf16.msra.mxu0 %v1764
    %1819 = vmatpush.bf16.msra.mxu0 %v1762
    %1820 = vmatpush.bf16.msra.mxu0 %v1760
    %1821 = vmatpush.bf16.msra.mxu0 %v1758
    %1822 = vmatmul.bf16.gmra.mxu0 %v900
    %v1823 = vpop.f32.mrf.mxu0
    %v1824 = vadd.f32 0.0, %v1823
    %v1825 = vpop.f32.mrf.mxu0
    %v1826 = vadd.f32 0.0, %v1825
    %1827 = vmatmul.bf16.gmra.mxu0 %v902
    %v1828 = vpop.f32.mrf.mxu0
    %v1829 = vadd.f32 0.0, %v1828
    %v1830 = vpop.f32.mrf.mxu0
    %v1831 = vadd.f32 0.0, %v1830
    %1832 = vdwg.mxu0
    %1833 = vmatpush.bf16.msra.mxu0 0
    %1834 = vmatpush.bf16.msra.mxu0 0
    %1835 = vmatpush.bf16.msra.mxu0 %v1784
    %1836 = vmatpush.bf16.msra.mxu0 %v1782
    %1837 = vmatpush.bf16.msra.mxu0 %v1780
    %1838 = vmatpush.bf16.msra.mxu0 %v1778
    %1839 = vmatpush.bf16.msra.mxu0 %v1776
    %1840 = vmatpush.bf16.msra.mxu0 %v1774
    %1841 = vmatmul.bf16.gmra.mxu0 %v1074
    %v1842 = vpop.f32.mrf.mxu0
    %v1843 = vadd.f32 %v1824, %v1842
    %v1844 = vpop.f32.mrf.mxu0
    %v1845 = vadd.f32 %v1826, %v1844
    %1846 = vmatmul.bf16.gmra.mxu0 %v1077
    %v1847 = vpop.f32.mrf.mxu0
    %v1848 = vadd.f32 %v1829, %v1847
    %v1849 = vpop.f32.mrf.mxu0
    %v1850 = vadd.f32 %v1831, %v1849
    %1851 = vdwg.mxu0
    %1852 = vmatpush.bf16.msra.mxu0 %v1773
    %1853 = vmatpush.bf16.msra.mxu0 %v1771
    %1854 = vmatpush.bf16.msra.mxu0 %v1769
    %1855 = vmatpush.bf16.msra.mxu0 %v1767
    %1856 = vmatpush.bf16.msra.mxu0 %v1765
    %1857 = vmatpush.bf16.msra.mxu0 %v1763
    %1858 = vmatpush.bf16.msra.mxu0 %v1761
    %1859 = vmatpush.bf16.msra.mxu0 %v1759
    %1860 = vmatmul.bf16.gmra.mxu0 %v900
    %v1861 = vpop.f32.mrf.mxu0
    %v1862 = vadd.f32 0.0, %v1861
    %v1863 = vpop.f32.mrf.mxu0
    %v1864 = vadd.f32 0.0, %v1863
    %1865 = vmatmul.bf16.gmra.mxu0 %v902
    %v1866 = vpop.f32.mrf.mxu0
    %v1867 = vadd.f32 0.0, %v1866
    %v1868 = vpop.f32.mrf.mxu0
    %v1869 = vadd.f32 0.0, %v1868
    %1870 = vdwg.mxu0
    %1871 = vmatpush.bf16.msra.mxu0 0
    %1872 = vmatpush.bf16.msra.mxu0 0
    %1873 = vmatpush.bf16.msra.mxu0 %v1785
    %1874 = vmatpush.bf16.msra.mxu0 %v1783
    %1875 = vmatpush.bf16.msra.mxu0 %v1781
    %1876 = vmatpush.bf16.msra.mxu0 %v1779
    %1877 = vmatpush.bf16.msra.mxu0 %v1777
    %1878 = vmatpush.bf16.msra.mxu0 %v1775
    %1879 = vmatmul.bf16.gmra.mxu0 %v1074
    %v1880 = vpop.f32.mrf.mxu0
    %v1881 = vadd.f32 %v1862, %v1880
    %v1882 = vpop.f32.mrf.mxu0
    %v1883 = vadd.f32 %v1864, %v1882
    %1884 = vmatmul.bf16.gmra.mxu0 %v1077
    %v1885 = vpop.f32.mrf.mxu0
    %v1886 = vadd.f32 %v1867, %v1885
    %v1887 = vpop.f32.mrf.mxu0
    %v1888 = vadd.f32 %v1869, %v1887
    %1889 = vdwg.mxu0
    %s1890 = scalar_lea.vmem %s4, 896
    %v1891 = vld [vmem:[%s1890] sm:$0xff]
    %v1892 = vld [vmem:[%s1890 + $0x8] sm:$0xff]
    %v1893 = vld [vmem:[%s1890 + $0x10] sm:$0xff]
    %v1894 = vld [vmem:[%s1890 + $0x18] sm:$0xff]
    %v1895 = vld [vmem:[%s1890 + $0x20] sm:$0xff]
    %v1896 = vld [vmem:[%s1890 + $0x28] sm:$0xff]
    %v1897 = vld [vmem:[%s1890 + $0x30] sm:$0xff]
    %v1898 = vld [vmem:[%s1890 + $0x38] sm:$0xff]
    %v1899 = vld [vmem:[%s1890 + $0x40] sm:$0xff]
    %v1900 = vld [vmem:[%s1890 + $0x48] sm:$0xff]
    %v1901 = vld [vmem:[%s1890 + $0x50] sm:$0xff]
    %v1902 = vld [vmem:[%s1890 + $0x58] sm:$0xff]
    %v1903 = vld [vmem:[%s1890 + $0x60] sm:$0xff]
    %v1904 = vld [vmem:[%s1890 + $0x68] sm:$0xff]
    %v1905 = vld [vmem:[%s1890 + $0x70] sm:$0xff]
    %v1906 = vld [vmem:[%s1890 + $0x78] sm:$0xff]
    %v1907 = vld [vmem:[%s1890 + $0x80] sm:$0xff]
    %v1908 = vld [vmem:[%s1890 + $0x88] sm:$0xff]
    %v1909 = vld [vmem:[%s1890 + $0x90] sm:$0xff]
    %v1910 = vld [vmem:[%s1890 + $0x98] sm:$0xff]
    %v1911 = vld [vmem:[%s1890 + $0xa0] sm:$0xff]
    %v1912 = vld [vmem:[%s1890 + $0xa8] sm:$0xff]
    %v1913 = vld [vmem:[%s1890 + $0xb0] sm:$0xff]
    %v1914 = vld [vmem:[%s1890 + $0xb8] sm:$0xff]
    %v1915 = vld [vmem:[%s1890 + $0xc0] sm:$0xff]
    %v1916 = vld [vmem:[%s1890 + $0xc8] sm:$0xff]
    %v1917 = vld [vmem:[%s1890 + $0xd0] sm:$0xff]
    %v1918 = vld [vmem:[%s1890 + $0xd8] sm:$0xff]
    %v1947 = vunpack.c.l.b16 %v1891
    %v1948 = vunpack.c.h.b16 %v1891
    %v1949 = vunpack.c.l.b16 %v1892
    %v1950 = vunpack.c.h.b16 %v1892
    %v1951 = vunpack.c.l.b16 %v1893
    %v1952 = vunpack.c.h.b16 %v1893
    %v1953 = vunpack.c.l.b16 %v1894
    %v1954 = vunpack.c.h.b16 %v1894
    %v1955 = vunpack.c.l.b16 %v1895
    %v1956 = vunpack.c.h.b16 %v1895
    %v1957 = vunpack.c.l.b16 %v1896
    %v1958 = vunpack.c.h.b16 %v1896
    %v1959 = vunpack.c.l.b16 %v1897
    %v1960 = vunpack.c.h.b16 %v1897
    %v1961 = vunpack.c.l.b16 %v1898
    %v1962 = vunpack.c.h.b16 %v1898
    %v1963 = vunpack.c.l.b16 %v1899
    %v1964 = vunpack.c.h.b16 %v1899
    %v1965 = vunpack.c.l.b16 %v1900
    %v1966 = vunpack.c.h.b16 %v1900
    %v1967 = vunpack.c.l.b16 %v1901
    %v1968 = vunpack.c.h.b16 %v1901
    %v1969 = vunpack.c.l.b16 %v1902
    %v1970 = vunpack.c.h.b16 %v1902
    %v1971 = vunpack.c.l.b16 %v1903
    %v1972 = vunpack.c.h.b16 %v1903
    %v1973 = vunpack.c.l.b16 %v1904
    %v1974 = vunpack.c.h.b16 %v1904
    %v1975 = vunpack.c.l.b16 %v1905
    %v1976 = vunpack.c.h.b16 %v1905
    %v1977 = vunpack.c.l.b16 %v1906
    %v1978 = vunpack.c.h.b16 %v1906
    %v1979 = vunpack.c.l.b16 %v1907
    %v1980 = vunpack.c.h.b16 %v1907
    %v1981 = vunpack.c.l.b16 %v1908
    %v1982 = vunpack.c.h.b16 %v1908
    %v1983 = vunpack.c.l.b16 %v1909
    %v1984 = vunpack.c.h.b16 %v1909
    %v1985 = vunpack.c.l.b16 %v1910
    %v1986 = vunpack.c.h.b16 %v1910
    %v1987 = vunpack.c.l.b16 %v1911
    %v1988 = vunpack.c.h.b16 %v1911
    %v1989 = vunpack.c.l.b16 %v1912
    %v1990 = vunpack.c.h.b16 %v1912
    %v1991 = vunpack.c.l.b16 %v1913
    %v1992 = vunpack.c.h.b16 %v1913
    %v1993 = vunpack.c.l.b16 %v1914
    %v1994 = vunpack.c.h.b16 %v1914
    %v1995 = vunpack.c.l.b16 %v1915
    %v1996 = vunpack.c.h.b16 %v1915
    %v1997 = vunpack.c.l.b16 %v1916
    %v1998 = vunpack.c.h.b16 %v1916
    %v1999 = vunpack.c.l.b16 %v1917
    %v2000 = vunpack.c.h.b16 %v1917
    %v2001 = vunpack.c.l.b16 %v1918
    %v2002 = vunpack.c.h.b16 %v1918
    %v2003 = vpack.c.b16 %v1949, %v1947
    %v2004 = vpack.c.b16 %v1950, %v1948
    %v2005 = vpack.c.b16 %v1953, %v1951
    %v2006 = vpack.c.b16 %v1954, %v1952
    %v2007 = vpack.c.b16 %v1957, %v1955
    %v2008 = vpack.c.b16 %v1958, %v1956
    %v2009 = vpack.c.b16 %v1961, %v1959
    %v2010 = vpack.c.b16 %v1962, %v1960
    %v2011 = vpack.c.b16 %v1965, %v1963
    %v2012 = vpack.c.b16 %v1966, %v1964
    %v2013 = vpack.c.b16 %v1969, %v1967
    %v2014 = vpack.c.b16 %v1970, %v1968
    %v2015 = vpack.c.b16 %v1973, %v1971
    %v2016 = vpack.c.b16 %v1974, %v1972
    %v2017 = vpack.c.b16 %v1977, %v1975
    %v2018 = vpack.c.b16 %v1978, %v1976
    %v2019 = vpack.c.b16 %v1981, %v1979
    %v2020 = vpack.c.b16 %v1982, %v1980
    %v2021 = vpack.c.b16 %v1985, %v1983
    %v2022 = vpack.c.b16 %v1986, %v1984
    %v2023 = vpack.c.b16 %v1989, %v1987
    %v2024 = vpack.c.b16 %v1990, %v1988
    %v2025 = vpack.c.b16 %v1993, %v1991
    %v2026 = vpack.c.b16 %v1994, %v1992
    %v2027 = vpack.c.b16 %v1997, %v1995
    %v2028 = vpack.c.b16 %v1998, %v1996
    %v2029 = vpack.c.b16 %v2001, %v1999
    %v2030 = vpack.c.b16 %v2002, %v2000
    %2059 = vmatpush.bf16.msra.mxu0 %v2017
    %2060 = vmatpush.bf16.msra.mxu0 %v2015
    %2061 = vmatpush.bf16.msra.mxu0 %v2013
    %2062 = vmatpush.bf16.msra.mxu0 %v2011
    %2063 = vmatpush.bf16.msra.mxu0 %v2009
    %2064 = vmatpush.bf16.msra.mxu0 %v2007
    %2065 = vmatpush.bf16.msra.mxu0 %v2005
    %2066 = vmatpush.bf16.msra.mxu0 %v2003
    %2067 = vmatmul.bf16.gmra.mxu0 %v900
    %v2068 = vpop.f32.mrf.mxu0
    %v2069 = vadd.f32 0.0, %v2068
    %v2070 = vpop.f32.mrf.mxu0
    %v2071 = vadd.f32 0.0, %v2070
    %2072 = vmatmul.bf16.gmra.mxu0 %v902
    %v2073 = vpop.f32.mrf.mxu0
    %v2074 = vadd.f32 0.0, %v2073
    %v2075 = vpop.f32.mrf.mxu0
    %v2076 = vadd.f32 0.0, %v2075
    %2077 = vdwg.mxu0
    %2078 = vmatpush.bf16.msra.mxu0 0
    %2079 = vmatpush.bf16.msra.mxu0 0
    %2080 = vmatpush.bf16.msra.mxu0 %v2029
    %2081 = vmatpush.bf16.msra.mxu0 %v2027
    %2082 = vmatpush.bf16.msra.mxu0 %v2025
    %2083 = vmatpush.bf16.msra.mxu0 %v2023
    %2084 = vmatpush.bf16.msra.mxu0 %v2021
    %2085 = vmatpush.bf16.msra.mxu0 %v2019
    %2086 = vmatmul.bf16.gmra.mxu0 %v1074
    %v2087 = vpop.f32.mrf.mxu0
    %v2088 = vadd.f32 %v2069, %v2087
    %v2089 = vpop.f32.mrf.mxu0
    %v2090 = vadd.f32 %v2071, %v2089
    %2091 = vmatmul.bf16.gmra.mxu0 %v1077
    %v2092 = vpop.f32.mrf.mxu0
    %v2093 = vadd.f32 %v2074, %v2092
    %v2094 = vpop.f32.mrf.mxu0
    %v2095 = vadd.f32 %v2076, %v2094
    %2096 = vdwg.mxu0
    %2097 = vmatpush.bf16.msra.mxu0 %v2018
    %2098 = vmatpush.bf16.msra.mxu0 %v2016
    %2099 = vmatpush.bf16.msra.mxu0 %v2014
    %2100 = vmatpush.bf16.msra.mxu0 %v2012
    %2101 = vmatpush.bf16.msra.mxu0 %v2010
    %2102 = vmatpush.bf16.msra.mxu0 %v2008
    %2103 = vmatpush.bf16.msra.mxu0 %v2006
    %2104 = vmatpush.bf16.msra.mxu0 %v2004
    %2105 = vmatmul.bf16.gmra.mxu0 %v900
    %v2106 = vpop.f32.mrf.mxu0
    %v2107 = vadd.f32 0.0, %v2106
    %v2108 = vpop.f32.mrf.mxu0
    %v2109 = vadd.f32 0.0, %v2108
    %2110 = vmatmul.bf16.gmra.mxu0 %v902
    %v2111 = vpop.f32.mrf.mxu0
    %v2112 = vadd.f32 0.0, %v2111
    %v2113 = vpop.f32.mrf.mxu0
    %v2114 = vadd.f32 0.0, %v2113
    %2115 = vdwg.mxu0
    %2116 = vmatpush.bf16.msra.mxu0 0
    %2117 = vmatpush.bf16.msra.mxu0 0
    %2118 = vmatpush.bf16.msra.mxu0 %v2030
    %2119 = vmatpush.bf16.msra.mxu0 %v2028
    %2120 = vmatpush.bf16.msra.mxu0 %v2026
    %2121 = vmatpush.bf16.msra.mxu0 %v2024
    %2122 = vmatpush.bf16.msra.mxu0 %v2022
    %2123 = vmatpush.bf16.msra.mxu0 %v2020
    %2124 = vmatmul.bf16.gmra.mxu0 %v1074
    %v2125 = vpop.f32.mrf.mxu0
    %v2126 = vadd.f32 %v2107, %v2125
    %v2127 = vpop.f32.mrf.mxu0
    %v2128 = vadd.f32 %v2109, %v2127
    %2129 = vmatmul.bf16.gmra.mxu0 %v1077
    %v2130 = vpop.f32.mrf.mxu0
    %v2131 = vadd.f32 %v2112, %v2130
    %v2132 = vpop.f32.mrf.mxu0
    %v2133 = vadd.f32 %v2114, %v2132
    %2134 = vdwg.mxu0
    %v2135 = vpack.c.bf16 %v1110, %v1108
    %v2136 = vpack.c.bf16 %v1148, %v1146
    %v2137 = vpack.c.bf16 %v1115, %v1113
    %v2138 = vpack.c.bf16 %v1153, %v1151
    %v2139 = vpack.c.bf16 %v1355, %v1353
    %v2140 = vpack.c.bf16 %v1393, %v1391
    %v2141 = vpack.c.bf16 %v1360, %v1358
    %v2142 = vpack.c.bf16 %v1398, %v1396
    %v2143 = vpack.c.bf16 %v1600, %v1598
    %v2144 = vpack.c.bf16 %v1638, %v1636
    %v2145 = vpack.c.bf16 %v1605, %v1603
    %v2146 = vpack.c.bf16 %v1643, %v1641
    %v2147 = vpack.c.bf16 %v1845, %v1843
    %v2148 = vpack.c.bf16 %v1883, %v1881
    %v2149 = vpack.c.bf16 %v1850, %v1848
    %v2150 = vpack.c.bf16 %v1888, %v1886
    %v2151 = vpack.c.bf16 %v2090, %v2088
    %v2152 = vpack.c.bf16 %v2128, %v2126
    %v2153 = vpack.c.bf16 %v2095, %v2093
    %v2154 = vpack.c.bf16 %v2133, %v2131
    %v2155 = vld [vmem:[%s5] sm:$0xff]
    %v2156 = vld [vmem:[%s5 + $0x8] sm:$0xff]
    %v2157 = vld [vmem:[%s6] sm:$0x3]
    %v2159 = vperm.slane %v2157, 0
    %v2160 = vperm.slane %v2157, 1
    %v2165 = vunpack.c.l.b16 %v2155
    %v2166 = vunpack.c.h.b16 %v2155
    %v2167 = vunpack.c.l.b16 %v2156
    %v2168 = vunpack.c.h.b16 %v2156
    %v2169 = vpack.c.b16 %v2167, %v2165
    %v2170 = vpack.c.b16 %v2168, %v2166
    %v2173 = vsel %vm90, %v2170, 0
    %2175 = vmatpush.bf16.msra.mxu0 %v2149
    %2176 = vmatpush.bf16.msra.mxu0 %v2147
    %2177 = vmatpush.bf16.msra.mxu0 %v2145
    %2178 = vmatpush.bf16.msra.mxu0 %v2143
    %2179 = vmatpush.bf16.msra.mxu0 %v2141
    %2180 = vmatpush.bf16.msra.mxu0 %v2139
    %2181 = vmatpush.bf16.msra.mxu0 %v2137
    %2182 = vmatpush.bf16.msra.mxu0 %v2135
    %2183 = vmatmul.bf16.gmra.mxu0 %v2169
    %v2184 = vpop.f32.mrf.mxu0
    %v2185 = vadd.f32 %v2159, %v2184
    %v2186 = vpop.f32.mrf.mxu0
    %v2187 = vadd.f32 %v2159, %v2186
    %2188 = vdwg.mxu0
    %2189 = vmatpush.bf16.msra.mxu0 0
    %2190 = vmatpush.bf16.msra.mxu0 0
    %2191 = vmatpush.bf16.msra.mxu0 0
    %2192 = vmatpush.bf16.msra.mxu0 0
    %2193 = vmatpush.bf16.msra.mxu0 0
    %2194 = vmatpush.bf16.msra.mxu0 0
    %2195 = vmatpush.bf16.msra.mxu0 %v2153
    %2196 = vmatpush.bf16.msra.mxu0 %v2151
    %2197 = vmatmul.bf16.gmra.mxu0 %v2173
    %v2198 = vpop.f32.mrf.mxu0
    %v2199 = vadd.f32 %v2185, %v2198
    %v2200 = vpop.f32.mrf.mxu0
    %v2201 = vadd.f32 %v2187, %v2200
    %2202 = vdwg.mxu0
    %2203 = vmatpush.bf16.msra.mxu0 %v2150
    %2204 = vmatpush.bf16.msra.mxu0 %v2148
    %2205 = vmatpush.bf16.msra.mxu0 %v2146
    %2206 = vmatpush.bf16.msra.mxu0 %v2144
    %2207 = vmatpush.bf16.msra.mxu0 %v2142
    %2208 = vmatpush.bf16.msra.mxu0 %v2140
    %2209 = vmatpush.bf16.msra.mxu0 %v2138
    %2210 = vmatpush.bf16.msra.mxu0 %v2136
    %2211 = vmatmul.bf16.gmra.mxu0 %v2169
    %v2212 = vpop.f32.mrf.mxu0
    %v2213 = vadd.f32 %v2160, %v2212
    %v2214 = vpop.f32.mrf.mxu0
    %v2215 = vadd.f32 %v2160, %v2214
    %2216 = vdwg.mxu0
    %2217 = vmatpush.bf16.msra.mxu0 0
    %2218 = vmatpush.bf16.msra.mxu0 0
    %2219 = vmatpush.bf16.msra.mxu0 0
    %2220 = vmatpush.bf16.msra.mxu0 0
    %2221 = vmatpush.bf16.msra.mxu0 0
    %2222 = vmatpush.bf16.msra.mxu0 0
    %2223 = vmatpush.bf16.msra.mxu0 %v2154
    %2224 = vmatpush.bf16.msra.mxu0 %v2152
    %2225 = vmatmul.bf16.gmra.mxu0 %v2173
    %v2226 = vpop.f32.mrf.mxu0
    %v2227 = vadd.f32 %v2213, %v2226
    %v2228 = vpop.f32.mrf.mxu0
    %v2229 = vadd.f32 %v2215, %v2228
    %2230 = vdwg.mxu0
    %v2231 = vmax.f32 %v2199, 0.0
    %v2232 = vmax.f32 %v2227, 0.0
    %v2233 = vmax.f32 %v2201, 0.0
    %v2234 = vmax.f32 %v2229, 0.0
    %v2235 = vpack.c.bf16 %v2233, %v2231
    %v2236 = vpack.c.bf16 %v2234, %v2232
    %v2237 = vld [vmem:[%s7] sm:$0xf]
    %v2238 = vld [vmem:[%s7 + $0x4] sm:$0xf]
    %v2239 = vld [vmem:[%s7 + $0x8] sm:$0xf]
    %v2240 = vld [vmem:[%s7 + $0xc] sm:$0xf]
    %v2241 = vld [vmem:[%s7 + $0x10] sm:$0xf]
    %v2242 = vld [vmem:[%s7 + $0x14] sm:$0xf]
    %v2243 = vld [vmem:[%s7 + $0x18] sm:$0xf]
    %v2244 = vld [vmem:[%s7 + $0x1c] sm:$0xf]
    %v2245 = vld [vmem:[%s7 + $0x20] sm:$0xf]
    %v2246 = vld [vmem:[%s7 + $0x24] sm:$0xf]
    %v2247 = vld [vmem:[%s7 + $0x28] sm:$0xf]
    %v2248 = vld [vmem:[%s7 + $0x2c] sm:$0xf]
    %v2249 = vld [vmem:[%s7 + $0x30] sm:$0xf]
    %v2250 = vld [vmem:[%s7 + $0x34] sm:$0xf]
    %v2251 = vld [vmem:[%s7 + $0x38] sm:$0xf]
    %v2252 = vld [vmem:[%s7 + $0x3c] sm:$0xf]
    %v2253 = vld [vmem:[%s7 + $0x40] sm:$0xf]
    %v2254 = vld [vmem:[%s7 + $0x44] sm:$0xf]
    %v2255 = vld [vmem:[%s7 + $0x48] sm:$0xf]
    %v2256 = vld [vmem:[%s7 + $0x4c] sm:$0xf]
    %v2277 = vunpack.c.l.b16 %v2237
    %v2278 = vunpack.c.l.b16 %v2238
    %v2279 = vunpack.c.l.b16 %v2239
    %v2280 = vunpack.c.l.b16 %v2240
    %v2281 = vunpack.c.l.b16 %v2241
    %v2282 = vunpack.c.l.b16 %v2242
    %v2283 = vunpack.c.l.b16 %v2243
    %v2284 = vunpack.c.l.b16 %v2244
    %v2285 = vunpack.c.l.b16 %v2245
    %v2286 = vunpack.c.l.b16 %v2246
    %v2287 = vunpack.c.l.b16 %v2247
    %v2288 = vunpack.c.l.b16 %v2248
    %v2289 = vunpack.c.l.b16 %v2249
    %v2290 = vunpack.c.l.b16 %v2250
    %v2291 = vunpack.c.l.b16 %v2251
    %v2292 = vunpack.c.l.b16 %v2252
    %v2293 = vunpack.c.l.b16 %v2253
    %v2294 = vunpack.c.l.b16 %v2254
    %v2295 = vunpack.c.l.b16 %v2255
    %v2296 = vunpack.c.l.b16 %v2256
    %v2297 = vpack.c.b16 %v2278, %v2277
    %v2298 = vpack.c.b16 %v2280, %v2279
    %v2299 = vpack.c.b16 %v2282, %v2281
    %v2300 = vpack.c.b16 %v2284, %v2283
    %v2301 = vpack.c.b16 %v2286, %v2285
    %v2302 = vpack.c.b16 %v2288, %v2287
    %v2303 = vpack.c.b16 %v2290, %v2289
    %v2304 = vpack.c.b16 %v2292, %v2291
    %v2305 = vpack.c.b16 %v2294, %v2293
    %v2306 = vpack.c.b16 %v2296, %v2295
    %v2318 = vsel %vm90, %v2236, 0
    %2320 = vmatpush.bf16.msra.mxu0 %v2304
    %2321 = vmatpush.bf16.msra.mxu0 %v2303
    %2322 = vmatpush.bf16.msra.mxu0 %v2302
    %2323 = vmatpush.bf16.msra.mxu0 %v2301
    %2324 = vmatpush.bf16.msra.mxu0 %v2300
    %2325 = vmatpush.bf16.msra.mxu0 %v2299
    %2326 = vmatpush.bf16.msra.mxu0 %v2298
    %2327 = vmatpush.bf16.msra.mxu0 %v2297
    %2328 = vmatmul.bf16.gmra.mxu0 %v2235
    %v2329 = vpop.f32.mrf.mxu0
    %v2330 = vadd.f32 0.0, %v2329
    %v2331 = vpop.f32.mrf.mxu0
    %v2332 = vadd.f32 0.0, %v2331
    %2333 = vdwg.mxu0
    %2334 = vmatpush.bf16.msra.mxu0 0
    %2335 = vmatpush.bf16.msra.mxu0 0
    %2336 = vmatpush.bf16.msra.mxu0 0
    %2337 = vmatpush.bf16.msra.mxu0 0
    %2338 = vmatpush.bf16.msra.mxu0 0
    %2339 = vmatpush.bf16.msra.mxu0 0
    %2340 = vmatpush.bf16.msra.mxu0 %v2306
    %2341 = vmatpush.bf16.msra.mxu0 %v2305
    %2342 = vmatmul.bf16.gmra.mxu0 %v2318
    %v2343 = vpop.f32.mrf.mxu0
    %v2344 = vadd.f32 %v2330, %v2343
    %v2345 = vpop.f32.mrf.mxu0
    %v2346 = vadd.f32 %v2332, %v2345
    %2347 = vdwg.mxu0
    %s2348 = scalar_lea.vmem %s7, 80
    %v2349 = vld [vmem:[%s2348] sm:$0xf]
    %v2350 = vld [vmem:[%s2348 + $0x4] sm:$0xf]
    %v2351 = vld [vmem:[%s2348 + $0x8] sm:$0xf]
    %v2352 = vld [vmem:[%s2348 + $0xc] sm:$0xf]
    %v2353 = vld [vmem:[%s2348 + $0x10] sm:$0xf]
    %v2354 = vld [vmem:[%s2348 + $0x14] sm:$0xf]
    %v2355 = vld [vmem:[%s2348 + $0x18] sm:$0xf]
    %v2356 = vld [vmem:[%s2348 + $0x1c] sm:$0xf]
    %v2357 = vld [vmem:[%s2348 + $0x20] sm:$0xf]
    %v2358 = vld [vmem:[%s2348 + $0x24] sm:$0xf]
    %v2359 = vld [vmem:[%s2348 + $0x28] sm:$0xf]
    %v2360 = vld [vmem:[%s2348 + $0x2c] sm:$0xf]
    %v2361 = vld [vmem:[%s2348 + $0x30] sm:$0xf]
    %v2362 = vld [vmem:[%s2348 + $0x34] sm:$0xf]
    %v2363 = vld [vmem:[%s2348 + $0x38] sm:$0xf]
    %v2364 = vld [vmem:[%s2348 + $0x3c] sm:$0xf]
    %v2365 = vld [vmem:[%s2348 + $0x40] sm:$0xf]
    %v2366 = vld [vmem:[%s2348 + $0x44] sm:$0xf]
    %v2367 = vld [vmem:[%s2348 + $0x48] sm:$0xf]
    %v2368 = vld [vmem:[%s2348 + $0x4c] sm:$0xf]
    %v2389 = vunpack.c.l.b16 %v2349
    %v2390 = vunpack.c.l.b16 %v2350
    %v2391 = vunpack.c.l.b16 %v2351
    %v2392 = vunpack.c.l.b16 %v2352
    %v2393 = vunpack.c.l.b16 %v2353
    %v2394 = vunpack.c.l.b16 %v2354
    %v2395 = vunpack.c.l.b16 %v2355
    %v2396 = vunpack.c.l.b16 %v2356
    %v2397 = vunpack.c.l.b16 %v2357
    %v2398 = vunpack.c.l.b16 %v2358
    %v2399 = vunpack.c.l.b16 %v2359
    %v2400 = vunpack.c.l.b16 %v2360
    %v2401 = vunpack.c.l.b16 %v2361
    %v2402 = vunpack.c.l.b16 %v2362
    %v2403 = vunpack.c.l.b16 %v2363
    %v2404 = vunpack.c.l.b16 %v2364
    %v2405 = vunpack.c.l.b16 %v2365
    %v2406 = vunpack.c.l.b16 %v2366
    %v2407 = vunpack.c.l.b16 %v2367
    %v2408 = vunpack.c.l.b16 %v2368
    %v2409 = vpack.c.b16 %v2390, %v2389
    %v2410 = vpack.c.b16 %v2392, %v2391
    %v2411 = vpack.c.b16 %v2394, %v2393
    %v2412 = vpack.c.b16 %v2396, %v2395
    %v2413 = vpack.c.b16 %v2398, %v2397
    %v2414 = vpack.c.b16 %v2400, %v2399
    %v2415 = vpack.c.b16 %v2402, %v2401
    %v2416 = vpack.c.b16 %v2404, %v2403
    %v2417 = vpack.c.b16 %v2406, %v2405
    %v2418 = vpack.c.b16 %v2408, %v2407
    %2429 = vmatpush.bf16.msra.mxu0 %v2416
    %2430 = vmatpush.bf16.msra.mxu0 %v2415
    %2431 = vmatpush.bf16.msra.mxu0 %v2414
    %2432 = vmatpush.bf16.msra.mxu0 %v2413
    %2433 = vmatpush.bf16.msra.mxu0 %v2412
    %2434 = vmatpush.bf16.msra.mxu0 %v2411
    %2435 = vmatpush.bf16.msra.mxu0 %v2410
    %2436 = vmatpush.bf16.msra.mxu0 %v2409
    %2437 = vmatmul.bf16.gmra.mxu0 %v2235
    %v2438 = vpop.f32.mrf.mxu0
    %v2439 = vadd.f32 0.0, %v2438
    %v2440 = vpop.f32.mrf.mxu0
    %v2441 = vadd.f32 0.0, %v2440
    %2442 = vdwg.mxu0
    %2443 = vmatpush.bf16.msra.mxu0 0
    %2444 = vmatpush.bf16.msra.mxu0 0
    %2445 = vmatpush.bf16.msra.mxu0 0
    %2446 = vmatpush.bf16.msra.mxu0 0
    %2447 = vmatpush.bf16.msra.mxu0 0
    %2448 = vmatpush.bf16.msra.mxu0 0
    %2449 = vmatpush.bf16.msra.mxu0 %v2418
    %2450 = vmatpush.bf16.msra.mxu0 %v2417
    %2451 = vmatmul.bf16.gmra.mxu0 %v2318
    %v2452 = vpop.f32.mrf.mxu0
    %v2453 = vadd.f32 %v2439, %v2452
    %v2454 = vpop.f32.mrf.mxu0
    %v2455 = vadd.f32 %v2441, %v2454
    %2456 = vdwg.mxu0
    %s2457 = scalar_lea.vmem %s7, 160
    %v2458 = vld [vmem:[%s2457] sm:$0xf]
    %v2459 = vld [vmem:[%s2457 + $0x4] sm:$0xf]
    %v2460 = vld [vmem:[%s2457 + $0x8] sm:$0xf]
    %v2461 = vld [vmem:[%s2457 + $0xc] sm:$0xf]
    %v2462 = vld [vmem:[%s2457 + $0x10] sm:$0xf]
    %v2463 = vld [vmem:[%s2457 + $0x14] sm:$0xf]
    %v2464 = vld [vmem:[%s2457 + $0x18] sm:$0xf]
    %v2465 = vld [vmem:[%s2457 + $0x1c] sm:$0xf]
    %v2466 = vld [vmem:[%s2457 + $0x20] sm:$0xf]
    %v2467 = vld [vmem:[%s2457 + $0x24] sm:$0xf]
    %v2468 = vld [vmem:[%s2457 + $0x28] sm:$0xf]
    %v2469 = vld [vmem:[%s2457 + $0x2c] sm:$0xf]
    %v2470 = vld [vmem:[%s2457 + $0x30] sm:$0xf]
    %v2471 = vld [vmem:[%s2457 + $0x34] sm:$0xf]
    %v2472 = vld [vmem:[%s2457 + $0x38] sm:$0xf]
    %v2473 = vld [vmem:[%s2457 + $0x3c] sm:$0xf]
    %v2474 = vld [vmem:[%s2457 + $0x40] sm:$0xf]
    %v2475 = vld [vmem:[%s2457 + $0x44] sm:$0xf]
    %v2476 = vld [vmem:[%s2457 + $0x48] sm:$0xf]
    %v2477 = vld [vmem:[%s2457 + $0x4c] sm:$0xf]
    %v2498 = vunpack.c.l.b16 %v2458
    %v2499 = vunpack.c.l.b16 %v2459
    %v2500 = vunpack.c.l.b16 %v2460
    %v2501 = vunpack.c.l.b16 %v2461
    %v2502 = vunpack.c.l.b16 %v2462
    %v2503 = vunpack.c.l.b16 %v2463
    %v2504 = vunpack.c.l.b16 %v2464
    %v2505 = vunpack.c.l.b16 %v2465
    %v2506 = vunpack.c.l.b16 %v2466
    %v2507 = vunpack.c.l.b16 %v2467
    %v2508 = vunpack.c.l.b16 %v2468
    %v2509 = vunpack.c.l.b16 %v2469
    %v2510 = vunpack.c.l.b16 %v2470
    %v2511 = vunpack.c.l.b16 %v2471
    %v2512 = vunpack.c.l.b16 %v2472
    %v2513 = vunpack.c.l.b16 %v2473
    %v2514 = vunpack.c.l.b16 %v2474
    %v2515 = vunpack.c.l.b16 %v2475
    %v2516 = vunpack.c.l.b16 %v2476
    %v2517 = vunpack.c.l.b16 %v2477
    %v2518 = vpack.c.b16 %v2499, %v2498
    %v2519 = vpack.c.b16 %v2501, %v2500
    %v2520 = vpack.c.b16 %v2503, %v2502
    %v2521 = vpack.c.b16 %v2505, %v2504
    %v2522 = vpack.c.b16 %v2507, %v2506
    %v2523 = vpack.c.b16 %v2509, %v2508
    %v2524 = vpack.c.b16 %v2511, %v2510
    %v2525 = vpack.c.b16 %v2513, %v2512
    %v2526 = vpack.c.b16 %v2515, %v2514
    %v2527 = vpack.c.b16 %v2517, %v2516
    %2538 = vmatpush.bf16.msra.mxu0 %v2525
    %2539 = vmatpush.bf16.msra.mxu0 %v2524
    %2540 = vmatpush.bf16.msra.mxu0 %v2523
    %2541 = vmatpush.bf16.msra.mxu0 %v2522
    %2542 = vmatpush.bf16.msra.mxu0 %v2521
    %2543 = vmatpush.bf16.msra.mxu0 %v2520
    %2544 = vmatpush.bf16.msra.mxu0 %v2519
    %2545 = vmatpush.bf16.msra.mxu0 %v2518
    %2546 = vmatmul.bf16.gmra.mxu0 %v2235
    %v2547 = vpop.f32.mrf.mxu0
    %v2548 = vadd.f32 0.0, %v2547
    %v2549 = vpop.f32.mrf.mxu0
    %v2550 = vadd.f32 0.0, %v2549
    %2551 = vdwg.mxu0
    %2552 = vmatpush.bf16.msra.mxu0 0
    %2553 = vmatpush.bf16.msra.mxu0 0
    %2554 = vmatpush.bf16.msra.mxu0 0
    %2555 = vmatpush.bf16.msra.mxu0 0
    %2556 = vmatpush.bf16.msra.mxu0 0
    %2557 = vmatpush.bf16.msra.mxu0 0
    %2558 = vmatpush.bf16.msra.mxu0 %v2527
    %2559 = vmatpush.bf16.msra.mxu0 %v2526
    %2560 = vmatmul.bf16.gmra.mxu0 %v2318
    %v2561 = vpop.f32.mrf.mxu0
    %v2562 = vadd.f32 %v2548, %v2561
    %v2563 = vpop.f32.mrf.mxu0
    %v2564 = vadd.f32 %v2550, %v2563
    %2565 = vdwg.mxu0
    %v2566 = vpack.c.bf16 %v2346, %v2344
    %v2567 = vpack.c.bf16 %v2455, %v2453
    %v2568 = vpack.c.bf16 %v2564, %v2562
    %v2569 = vld [vmem:[%s8] sm:$0x1]
    %vm2570 = vcmask 392192
    %v2572 = vsel %vm2570, %v2569, 0
    %2574 = vmatpush.bf16.msra.mxu0 0
    %2575 = vmatpush.bf16.msra.mxu0 0
    %2576 = vmatpush.bf16.msra.mxu0 0
    %2577 = vmatpush.bf16.msra.mxu0 0
    %2578 = vmatpush.bf16.msra.mxu0 0
    %2579 = vmatpush.bf16.msra.mxu0 %v2568
    %2580 = vmatpush.bf16.msra.mxu0 %v2567
    %2581 = vmatpush.bf16.msra.mxu0 %v2566
    %2582 = vmatmul.bf16.gmra.mxu0 %v2572
    %v2583 = vpop.f32.mrf.mxu0
    %v2584 = vadd.f32 0.0, %v2583
    %v2585 = vpop.f32.mrf.mxu0
    %2586 = vdwg.mxu0
    %s2587 = scalar_lea.vmem %s8, 1
    %v2588 = vld [vmem:[%s2587] sm:$0x1]
    %v2590 = vsel %vm2570, %v2588, 0
    %2592 = vmatpush.bf16.msra.mxu0 0
    %2593 = vmatpush.bf16.msra.mxu0 0
    %2594 = vmatpush.bf16.msra.mxu0 0
    %2595 = vmatpush.bf16.msra.mxu0 0
    %2596 = vmatpush.bf16.msra.mxu0 0
    %2597 = vmatpush.bf16.msra.mxu0 %v2568
    %2598 = vmatpush.bf16.msra.mxu0 %v2567
    %2599 = vmatpush.bf16.msra.mxu0 %v2566
    %2600 = vmatmul.bf16.gmra.mxu0 %v2590
    %v2601 = vpop.f32.mrf.mxu0
    %v2602 = vadd.f32 0.0, %v2601
    %v2603 = vpop.f32.mrf.mxu0
    %2604 = vdwg.mxu0
    %v2605 = vld [vmem:[%s9] sm:$0x3]
    %v2607 = vperm.slane %v2605, 0
    %v2608 = vperm.slane %v2605, 1
    %v2611 = vadd.f32 %v2584, %v2607
    %v2612 = vadd.f32 %v2602, %v2608
    %v2613 = vmax.f32 %v2611, 0.0
    %v2614 = vmax.f32 %v2612, 0.0
    %v2615 = vpack.c.bf16 %v2613, %v2613
    %v2616 = vpack.c.bf16 %v2614, %v2614
    %v2617 = vld [vmem:[%s10] sm:$0xff]
    %v2618 = vld [vmem:[%s10 + $0x8] sm:$0xff]
    %v2619 = vld [vmem:[%s10 + $0x10] sm:$0xff]
    %v2620 = vld [vmem:[%s10 + $0x18] sm:$0xff]
    %v2621 = vld [vmem:[%s10 + $0x20] sm:$0xff]
    %v2622 = vld [vmem:[%s10 + $0x28] sm:$0xff]
    %v2623 = vld [vmem:[%s10 + $0x30] sm:$0xff]
    %v2624 = vld [vmem:[%s10 + $0x38] sm:$0xff]
    %v2625 = vld [vmem:[%s10 + $0x40] sm:$0xff]
    %v2626 = vld [vmem:[%s10 + $0x48] sm:$0xff]
    %v2627 = vld [vmem:[%s10 + $0x50] sm:$0xff]
    %v2628 = vld [vmem:[%s10 + $0x58] sm:$0xff]
    %v2629 = vld [vmem:[%s10 + $0x60] sm:$0xff]
    %v2630 = vld [vmem:[%s10 + $0x68] sm:$0xff]
    %v2631 = vld [vmem:[%s10 + $0x70] sm:$0xff]
    %v2632 = vld [vmem:[%s10 + $0x78] sm:$0xff]
    %v2633 = vld [vmem:[%s10 + $0x80] sm:$0xff]
    %v2634 = vld [vmem:[%s10 + $0x88] sm:$0xff]
    %v2635 = vld [vmem:[%s10 + $0x90] sm:$0xff]
    %v2636 = vld [vmem:[%s10 + $0x98] sm:$0xff]
    %v2637 = vld [vmem:[%s10 + $0xa0] sm:$0xff]
    %v2638 = vld [vmem:[%s10 + $0xa8] sm:$0xff]
    %v2639 = vld [vmem:[%s10 + $0xb0] sm:$0xff]
    %v2640 = vld [vmem:[%s10 + $0xb8] sm:$0xff]
    %v2641 = vld [vmem:[%s10 + $0xc0] sm:$0xff]
    %v2642 = vld [vmem:[%s10 + $0xc8] sm:$0xff]
    %v2643 = vld [vmem:[%s10 + $0xd0] sm:$0xff]
    %v2644 = vld [vmem:[%s10 + $0xd8] sm:$0xff]
    %v2645 = vld [vmem:[%s10 + $0xe0] sm:$0xff]
    %v2646 = vld [vmem:[%s10 + $0xe8] sm:$0xff]
    %v2647 = vld [vmem:[%s10 + $0xf0] sm:$0xff]
    %v2648 = vld [vmem:[%s10 + $0xf8] sm:$0xff]
    %v2649 = vld [vmem:[%s11] sm:$0x3]
    %v2651 = vperm.slane %v2649, 0
    %v2652 = vperm.slane %v2649, 1
    %v2687 = vunpack.c.l.b16 %v2617
    %v2688 = vunpack.c.h.b16 %v2617
    %v2689 = vunpack.c.l.b16 %v2618
    %v2690 = vunpack.c.h.b16 %v2618
    %v2691 = vunpack.c.l.b16 %v2619
    %v2692 = vunpack.c.h.b16 %v2619
    %v2693 = vunpack.c.l.b16 %v2620
    %v2694 = vunpack.c.h.b16 %v2620
    %v2695 = vunpack.c.l.b16 %v2621
    %v2696 = vunpack.c.h.b16 %v2621
    %v2697 = vunpack.c.l.b16 %v2622
    %v2698 = vunpack.c.h.b16 %v2622
    %v2699 = vunpack.c.l.b16 %v2623
    %v2700 = vunpack.c.h.b16 %v2623
    %v2701 = vunpack.c.l.b16 %v2624
    %v2702 = vunpack.c.h.b16 %v2624
    %v2703 = vunpack.c.l.b16 %v2625
    %v2704 = vunpack.c.h.b16 %v2625
    %v2705 = vunpack.c.l.b16 %v2626
    %v2706 = vunpack.c.h.b16 %v2626
    %v2707 = vunpack.c.l.b16 %v2627
    %v2708 = vunpack.c.h.b16 %v2627
    %v2709 = vunpack.c.l.b16 %v2628
    %v2710 = vunpack.c.h.b16 %v2628
    %v2711 = vunpack.c.l.b16 %v2629
    %v2712 = vunpack.c.h.b16 %v2629
    %v2713 = vunpack.c.l.b16 %v2630
    %v2714 = vunpack.c.h.b16 %v2630
    %v2715 = vunpack.c.l.b16 %v2631
    %v2716 = vunpack.c.h.b16 %v2631
    %v2717 = vunpack.c.l.b16 %v2632
    %v2718 = vunpack.c.h.b16 %v2632
    %v2719 = vunpack.c.l.b16 %v2633
    %v2720 = vunpack.c.h.b16 %v2633
    %v2721 = vunpack.c.l.b16 %v2634
    %v2722 = vunpack.c.h.b16 %v2634
    %v2723 = vunpack.c.l.b16 %v2635
    %v2724 = vunpack.c.h.b16 %v2635
    %v2725 = vunpack.c.l.b16 %v2636
    %v2726 = vunpack.c.h.b16 %v2636
    %v2727 = vunpack.c.l.b16 %v2637
    %v2728 = vunpack.c.h.b16 %v2637
    %v2729 = vunpack.c.l.b16 %v2638
    %v2730 = vunpack.c.h.b16 %v2638
    %v2731 = vunpack.c.l.b16 %v2639
    %v2732 = vunpack.c.h.b16 %v2639
    %v2733 = vunpack.c.l.b16 %v2640
    %v2734 = vunpack.c.h.b16 %v2640
    %v2735 = vunpack.c.l.b16 %v2641
    %v2736 = vunpack.c.h.b16 %v2641
    %v2737 = vunpack.c.l.b16 %v2642
    %v2738 = vunpack.c.h.b16 %v2642
    %v2739 = vunpack.c.l.b16 %v2643
    %v2740 = vunpack.c.h.b16 %v2643
    %v2741 = vunpack.c.l.b16 %v2644
    %v2742 = vunpack.c.h.b16 %v2644
    %v2743 = vunpack.c.l.b16 %v2645
    %v2744 = vunpack.c.h.b16 %v2645
    %v2745 = vunpack.c.l.b16 %v2646
    %v2746 = vunpack.c.h.b16 %v2646
    %v2747 = vunpack.c.l.b16 %v2647
    %v2748 = vunpack.c.h.b16 %v2647
    %v2749 = vunpack.c.l.b16 %v2648
    %v2750 = vunpack.c.h.b16 %v2648
    %v2751 = vpack.c.b16 %v2689, %v2687
    %v2752 = vpack.c.b16 %v2690, %v2688
    %v2753 = vpack.c.b16 %v2693, %v2691
    %v2754 = vpack.c.b16 %v2694, %v2692
    %v2755 = vpack.c.b16 %v2697, %v2695
    %v2756 = vpack.c.b16 %v2698, %v2696
    %v2757 = vpack.c.b16 %v2701, %v2699
    %v2758 = vpack.c.b16 %v2702, %v2700
    %v2759 = vpack.c.b16 %v2705, %v2703
    %v2760 = vpack.c.b16 %v2706, %v2704
    %v2761 = vpack.c.b16 %v2709, %v2707
    %v2762 = vpack.c.b16 %v2710, %v2708
    %v2763 = vpack.c.b16 %v2713, %v2711
    %v2764 = vpack.c.b16 %v2714, %v2712
    %v2765 = vpack.c.b16 %v2717, %v2715
    %v2766 = vpack.c.b16 %v2718, %v2716
    %v2767 = vpack.c.b16 %v2721, %v2719
    %v2768 = vpack.c.b16 %v2722, %v2720
    %v2769 = vpack.c.b16 %v2725, %v2723
    %v2770 = vpack.c.b16 %v2726, %v2724
    %v2771 = vpack.c.b16 %v2729, %v2727
    %v2772 = vpack.c.b16 %v2730, %v2728
    %v2773 = vpack.c.b16 %v2733, %v2731
    %v2774 = vpack.c.b16 %v2734, %v2732
    %v2775 = vpack.c.b16 %v2737, %v2735
    %v2776 = vpack.c.b16 %v2738, %v2736
    %v2777 = vpack.c.b16 %v2741, %v2739
    %v2778 = vpack.c.b16 %v2742, %v2740
    %v2779 = vpack.c.b16 %v2745, %v2743
    %v2780 = vpack.c.b16 %v2746, %v2744
    %v2781 = vpack.c.b16 %v2749, %v2747
    %v2782 = vpack.c.b16 %v2750, %v2748
    %2815 = vmatpush.bf16.msra.mxu0 %v2765
    %2816 = vmatpush.bf16.msra.mxu0 %v2763
    %2817 = vmatpush.bf16.msra.mxu0 %v2761
    %2818 = vmatpush.bf16.msra.mxu0 %v2759
    %2819 = vmatpush.bf16.msra.mxu0 %v2757
    %2820 = vmatpush.bf16.msra.mxu0 %v2755
    %2821 = vmatpush.bf16.msra.mxu0 %v2753
    %2822 = vmatpush.bf16.msra.mxu0 %v2751
    %2823 = vmatmul.bf16.gmra.mxu0 %v2615
    %v2824 = vpop.f32.mrf.mxu0
    %v2825 = vadd.f32 %v2651, %v2824
    %v2826 = vpop.f32.mrf.mxu0
    %2827 = vdwg.mxu0
    %2828 = vmatpush.bf16.msra.mxu0 %v2781
    %2829 = vmatpush.bf16.msra.mxu0 %v2779
    %2830 = vmatpush.bf16.msra.mxu0 %v2777
    %2831 = vmatpush.bf16.msra.mxu0 %v2775
    %2832 = vmatpush.bf16.msra.mxu0 %v2773
    %2833 = vmatpush.bf16.msra.mxu0 %v2771
    %2834 = vmatpush.bf16.msra.mxu0 %v2769
    %2835 = vmatpush.bf16.msra.mxu0 %v2767
    %2836 = vmatmul.bf16.gmra.mxu0 %v2616
    %v2837 = vpop.f32.mrf.mxu0
    %v2838 = vadd.f32 %v2825, %v2837
    %v2839 = vpop.f32.mrf.mxu0
    %2840 = vdwg.mxu0
    %2841 = vmatpush.bf16.msra.mxu0 %v2766
    %2842 = vmatpush.bf16.msra.mxu0 %v2764
    %2843 = vmatpush.bf16.msra.mxu0 %v2762
    %2844 = vmatpush.bf16.msra.mxu0 %v2760
    %2845 = vmatpush.bf16.msra.mxu0 %v2758
    %2846 = vmatpush.bf16.msra.mxu0 %v2756
    %2847 = vmatpush.bf16.msra.mxu0 %v2754
    %2848 = vmatpush.bf16.msra.mxu0 %v2752
    %2849 = vmatmul.bf16.gmra.mxu0 %v2615
    %v2850 = vpop.f32.mrf.mxu0
    %v2851 = vadd.f32 %v2652, %v2850
    %v2852 = vpop.f32.mrf.mxu0
    %2853 = vdwg.mxu0
    %2854 = vmatpush.bf16.msra.mxu0 %v2782
    %2855 = vmatpush.bf16.msra.mxu0 %v2780
    %2856 = vmatpush.bf16.msra.mxu0 %v2778
    %2857 = vmatpush.bf16.msra.mxu0 %v2776
    %2858 = vmatpush.bf16.msra.mxu0 %v2774
    %2859 = vmatpush.bf16.msra.mxu0 %v2772
    %2860 = vmatpush.bf16.msra.mxu0 %v2770
    %2861 = vmatpush.bf16.msra.mxu0 %v2768
    %2862 = vmatmul.bf16.gmra.mxu0 %v2616
    %v2863 = vpop.f32.mrf.mxu0
    %v2864 = vadd.f32 %v2851, %v2863
    %v2865 = vpop.f32.mrf.mxu0
    %2866 = vdwg.mxu0
    %v2867 = vmax.f32 %v2838, 0.0
    %v2868 = vmax.f32 %v2864, 0.0
    %v2869 = vpack.c.bf16 %v2867, %v2867
    %v2870 = vpack.c.bf16 %v2868, %v2868
    %v2871 = vld [vmem:[%s12] sm:$0xf]
    %v2872 = vld [vmem:[%s12 + $0x4] sm:$0xf]
    %v2873 = vld [vmem:[%s12 + $0x8] sm:$0xf]
    %v2874 = vld [vmem:[%s12 + $0xc] sm:$0xf]
    %v2875 = vld [vmem:[%s12 + $0x10] sm:$0xf]
    %v2876 = vld [vmem:[%s12 + $0x14] sm:$0xf]
    %v2877 = vld [vmem:[%s12 + $0x18] sm:$0xf]
    %v2878 = vld [vmem:[%s12 + $0x1c] sm:$0xf]
    %v2879 = vld [vmem:[%s12 + $0x20] sm:$0xf]
    %v2880 = vld [vmem:[%s12 + $0x24] sm:$0xf]
    %v2881 = vld [vmem:[%s12 + $0x28] sm:$0xf]
    %v2882 = vld [vmem:[%s12 + $0x2c] sm:$0xf]
    %v2883 = vld [vmem:[%s12 + $0x30] sm:$0xf]
    %v2884 = vld [vmem:[%s12 + $0x34] sm:$0xf]
    %v2885 = vld [vmem:[%s12 + $0x38] sm:$0xf]
    %v2886 = vld [vmem:[%s12 + $0x3c] sm:$0xf]
    %v2887 = vld [vmem:[%s12 + $0x40] sm:$0xf]
    %v2888 = vld [vmem:[%s12 + $0x44] sm:$0xf]
    %v2889 = vld [vmem:[%s12 + $0x48] sm:$0xf]
    %v2890 = vld [vmem:[%s12 + $0x4c] sm:$0xf]
    %v2891 = vld [vmem:[%s12 + $0x50] sm:$0xf]
    %v2892 = vld [vmem:[%s12 + $0x54] sm:$0xf]
    %v2893 = vld [vmem:[%s12 + $0x58] sm:$0xf]
    %v2894 = vld [vmem:[%s12 + $0x5c] sm:$0xf]
    %v2895 = vld [vmem:[%s12 + $0x60] sm:$0xf]
    %v2896 = vld [vmem:[%s12 + $0x64] sm:$0xf]
    %v2897 = vld [vmem:[%s12 + $0x68] sm:$0xf]
    %v2898 = vld [vmem:[%s12 + $0x6c] sm:$0xf]
    %v2899 = vld [vmem:[%s12 + $0x70] sm:$0xf]
    %v2900 = vld [vmem:[%s12 + $0x74] sm:$0xf]
    %v2901 = vld [vmem:[%s12 + $0x78] sm:$0xf]
    %v2902 = vld [vmem:[%s12 + $0x7c] sm:$0xf]
    %v2903 = vld [vmem:[%s13] sm:$0x1]
    %v2905 = vperm.slane %v2903, 0
    %v2939 = vunpack.c.l.b16 %v2871
    %v2940 = vunpack.c.l.b16 %v2872
    %v2941 = vunpack.c.l.b16 %v2873
    %v2942 = vunpack.c.l.b16 %v2874
    %v2943 = vunpack.c.l.b16 %v2875
    %v2944 = vunpack.c.l.b16 %v2876
    %v2945 = vunpack.c.l.b16 %v2877
    %v2946 = vunpack.c.l.b16 %v2878
    %v2947 = vunpack.c.l.b16 %v2879
    %v2948 = vunpack.c.l.b16 %v2880
    %v2949 = vunpack.c.l.b16 %v2881
    %v2950 = vunpack.c.l.b16 %v2882
    %v2951 = vunpack.c.l.b16 %v2883
    %v2952 = vunpack.c.l.b16 %v2884
    %v2953 = vunpack.c.l.b16 %v2885
    %v2954 = vunpack.c.l.b16 %v2886
    %v2955 = vunpack.c.l.b16 %v2887
    %v2956 = vunpack.c.l.b16 %v2888
    %v2957 = vunpack.c.l.b16 %v2889
    %v2958 = vunpack.c.l.b16 %v2890
    %v2959 = vunpack.c.l.b16 %v2891
    %v2960 = vunpack.c.l.b16 %v2892
    %v2961 = vunpack.c.l.b16 %v2893
    %v2962 = vunpack.c.l.b16 %v2894
    %v2963 = vunpack.c.l.b16 %v2895
    %v2964 = vunpack.c.l.b16 %v2896
    %v2965 = vunpack.c.l.b16 %v2897
    %v2966 = vunpack.c.l.b16 %v2898
    %v2967 = vunpack.c.l.b16 %v2899
    %v2968 = vunpack.c.l.b16 %v2900
    %v2969 = vunpack.c.l.b16 %v2901
    %v2970 = vunpack.c.l.b16 %v2902
    %v2971 = vpack.c.b16 %v2940, %v2939
    %v2972 = vpack.c.b16 %v2942, %v2941
    %v2973 = vpack.c.b16 %v2944, %v2943
    %v2974 = vpack.c.b16 %v2946, %v2945
    %v2975 = vpack.c.b16 %v2948, %v2947
    %v2976 = vpack.c.b16 %v2950, %v2949
    %v2977 = vpack.c.b16 %v2952, %v2951
    %v2978 = vpack.c.b16 %v2954, %v2953
    %v2979 = vpack.c.b16 %v2956, %v2955
    %v2980 = vpack.c.b16 %v2958, %v2957
    %v2981 = vpack.c.b16 %v2960, %v2959
    %v2982 = vpack.c.b16 %v2962, %v2961
    %v2983 = vpack.c.b16 %v2964, %v2963
    %v2984 = vpack.c.b16 %v2966, %v2965
    %v2985 = vpack.c.b16 %v2968, %v2967
    %v2986 = vpack.c.b16 %v2970, %v2969
    %3003 = vmatpush.bf16.msra.mxu0 %v2978
    %3004 = vmatpush.bf16.msra.mxu0 %v2977
    %3005 = vmatpush.bf16.msra.mxu0 %v2976
    %3006 = vmatpush.bf16.msra.mxu0 %v2975
    %3007 = vmatpush.bf16.msra.mxu0 %v2974
    %3008 = vmatpush.bf16.msra.mxu0 %v2973
    %3009 = vmatpush.bf16.msra.mxu0 %v2972
    %3010 = vmatpush.bf16.msra.mxu0 %v2971
    %3011 = vmatmul.bf16.gmra.mxu0 %v2869
    %v3012 = vpop.f32.mrf.mxu0
    %v3013 = vadd.f32 %v2905, %v3012
    %v3014 = vpop.f32.mrf.mxu0
    %3015 = vdwg.mxu0
    %3016 = vmatpush.bf16.msra.mxu0 %v2986
    %3017 = vmatpush.bf16.msra.mxu0 %v2985
    %3018 = vmatpush.bf16.msra.mxu0 %v2984
    %3019 = vmatpush.bf16.msra.mxu0 %v2983
    %3020 = vmatpush.bf16.msra.mxu0 %v2982
    %3021 = vmatpush.bf16.msra.mxu0 %v2981
    %3022 = vmatpush.bf16.msra.mxu0 %v2980
    %3023 = vmatpush.bf16.msra.mxu0 %v2979
    %3024 = vmatmul.bf16.gmra.mxu0 %v2870
    %v3025 = vpop.f32.mrf.mxu0
    %v3026 = vadd.f32 %v3013, %v3025
    %v3027 = vpop.f32.mrf.mxu0
    %3028 = vdwg.mxu0
    %vm3029 = vcmask 25600
    %3030 = vst.msk [vmem:[#allocation2] sm:$0x3] %vm3029, %v3026
    // Predicated region
    $region58: #{dqn_conv_forward.1} parent=1 // pred_check
      _
    $region59: #{dqn_conv_forward.1} parent=1 // pred_check_branch
      %3032 = sbr.rel (0) target = $region61
    $region60: #{dqn_conv_forward.1} parent=1 // pred_region
      %3034 = vsyncadd [#allocation3], 0
      %s3036 = sshll.u32 [#allocation2], 4
      %s3037 = int_to_ptr.vmem [resolvable:$true] %s3036
      %s3038 = sshll.u32 %s14, 4
      %s3039 = int_to_ptr.hbm [resolvable:$true] %s3038
      %3041 = dma.vmem_to_hbm [thread:$0]  %s3037, 32, %s3039, [#allocation3]
    $region61: #{dqn_conv_forward.1} parent=1 // pred_fallthru
      _
    // Predicated region
    $region62: #{dqn_conv_forward.1} parent=1 // pred_check
      _
    $region63: #{dqn_conv_forward.1} parent=1 // pred_check_branch
      %3043 = sbr.rel (0) target = $region65
    $region64: #{dqn_conv_forward.1} parent=1 // pred_region
      %3045 = dma.done [#allocation3], 32
    $region65: #{dqn_conv_forward.1} parent=1 // pred_fallthru
      _
    %3046 = vsyncpa [#allocation3], 1

</llo_original>
